<compile_context>
chip_gen: v6e
topology: v6e:2x2x1
jax: 0.10.0
libtpu: 0.0.40
codegen_flags: <defaults>
</compile_context>

<pallas_src>
import math

import jax
import jax.numpy as jnp
from jax.experimental import pallas as pl
from jax.experimental.pallas import tpu as pltpu


def _pick_tile(n, quantum, max_tile):
    """Largest multiple of `quantum` that divides `n` and is <= max_tile, else n (untiled)."""
    best = None
    t = quantum
    while t <= min(n, max_tile):
        if n % t == 0:
            best = t
        t += quantum
    return best if best is not None else n


def _make_fused_kernel(cin, cout, H, W, KH, KW, TH, act_fn, eps, n_elems):
    Wo = W - KW + 1

    def kernel(x_ref, w_ref, b_ref, g_ref, bt_ref, o_ref):
        # x_ref : (1, cin, H, W)        per-sample input, VMEM resident across row tiles
        # w_ref : (cout, KH*KW*cin)     folded conv weights (columns ordered kh, kw, cin)
        # b_ref : (cout, 1)             conv bias (f32)
        # g_ref : (cout, 1)             GroupNorm gamma (f32)
        # bt_ref: (cout, 1)             GroupNorm beta (f32)
        # o_ref : (1, cout, Ho, Wo)     per-sample output, VMEM resident across row tiles
        t = pl.program_id(1)
        row0 = t * TH
        if TH % 8 == 0:
            row0 = pl.multiple_of(row0, 8)

        # ---- 3x3 conv as ONE deep MXU contraction over K = KH*KW*cin ----------
        halo = x_ref[0, :, pl.ds(row0, TH + KH - 1), :]           # (cin, TH+KH-1, W)
        patches = []
        for kh in range(KH):
            band = halo[:, kh:kh + TH, :]                         # (cin, TH, W)
            for kw in range(KW):
                patches.append(band[:, :, kw:kw + Wo])            # (cin, TH, Wo)
        rhs = jnp.concatenate(patches, axis=0).reshape(KH * KW * cin, TH * Wo)

        y = jnp.dot(w_ref[...], rhs, preferred_element_type=jnp.float32)
        y = y + b_ref[...]                                        # (cout, TH*Wo) + (cout, 1)
        a = act_fn(y)
        o_ref[0, :, pl.ds(row0, TH), :] = a.reshape(cout, TH, Wo).astype(o_ref.dtype)

        # ---- fused GroupNorm(1, cout): epilogue on the resident block ---------
        @pl.when(t == pl.num_programs(1) - 1)
        def _():
            full = o_ref[0].astype(jnp.float32)                   # (cout, Ho, Wo)
            mean = jnp.sum(full, keepdims=True) / n_elems         # (1, 1, 1)
            centered = full - mean
            var = jnp.sum(centered * centered, keepdims=True) / n_elems
            rstd = jax.lax.rsqrt(var + eps)
            scale = g_ref[...].reshape(cout, 1, 1) * rstd         # (cout, 1, 1)
            shift = bt_ref[...].reshape(cout, 1, 1)
            o_ref[0] = (centered * scale + shift).astype(o_ref.dtype)

    return kernel


def conv_act_norm(x, weight, bias, gamma, beta, *, act=None, eps=1e-5,
                  compute_dtype=None, max_row_tile=128):
    """ConvActNorm forward, NCHW in / NCHW out; kernel KHxKW, stride 1, padding 0."""
    B, Cin, H, W = x.shape
    Cout, Cin_w, KH, KW = weight.shape
    assert Cin_w == Cin
    Ho, Wo = H - KH + 1, W - KW + 1
    act_fn = act if act is not None else (lambda v: v)
    cdt = compute_dtype if compute_dtype is not None else x.dtype
    out_dtype = x.dtype

    xin = x.astype(cdt)
    # (Cout, Cin, KH, KW) -> (Cout, KH*KW*Cin); column order = (kh-major, kw, cin).
    wmat = jnp.transpose(weight, (0, 2, 3, 1)).reshape(Cout, KH * KW * Cin).astype(cdt)
    bias2 = bias.reshape(Cout, 1).astype(jnp.float32)
    gamma2 = gamma.reshape(Cout, 1).astype(jnp.float32)
    beta2 = beta.reshape(Cout, 1).astype(jnp.float32)

    TH = _pick_tile(Ho, 8, max_row_tile)     # output-row tile (8-aligned when possible)
    Tn = Ho // TH
    n_elems = float(Cout * Ho * Wo)

    kernel = _make_fused_kernel(Cin, Cout, H, W, KH, KW, TH, act_fn, eps, n_elems)
    out = pl.pallas_call(
        kernel,
        out_shape=jax.ShapeDtypeStruct((B, Cout, Ho, Wo), out_dtype),
        grid=(B, Tn),
        in_specs=[
            pl.BlockSpec((1, Cin, H, W), lambda b, t: (b, 0, 0, 0)),
            pl.BlockSpec((Cout, KH * KW * Cin), lambda b, t: (0, 0)),
            pl.BlockSpec((Cout, 1), lambda b, t: (0, 0)),
            pl.BlockSpec((Cout, 1), lambda b, t: (0, 0)),
            pl.BlockSpec((Cout, 1), lambda b, t: (0, 0)),
        ],
        out_specs=pl.BlockSpec((1, Cout, Ho, Wo), lambda b, t: (b, 0, 0, 0)),
        compiler_params=pltpu.CompilerParams(
            dimension_semantics=("parallel", "arbitrary"),
            vmem_limit_bytes=48 * 1024 * 1024,
        ),
    )(xin, wmat, bias2, gamma2, beta2)
    return out


# ---------------------------------------------------------------------------
# Pure-JAX reference (same math as the PyTorch module).
# ---------------------------------------------------------------------------
def conv_act_norm_reference(x, weight, bias, gamma, beta, *, act=None, eps=1e-5):
    y = jax.lax.conv_general_dilated(
        x, weight, window_strides=(1, 1), padding="VALID",
        dimension_numbers=("NCHW", "OIHW", "NCHW"),
        precision=jax.lax.Precision.HIGHEST,
    )
    y = y + bias[None, :, None, None]
    if act is not None:
        y = act(y)
    mean = jnp.mean(y, axis=(1, 2, 3), keepdims=True)
    var = jnp.var(y, axis=(1, 2, 3), keepdims=True)
    y = (y - mean) * jax.lax.rsqrt(var + eps)
    return y * gamma[None, :, None, None] + beta[None, :, None, None]


if __name__ == "__main__":
    key = jax.random.PRNGKey(0)
    kx, kw_, kb, kg, kbt = jax.random.split(key, 5)

    B, Cin, Cout, H, W = 2, 4, 8, 16, 16
    x = jax.random.normal(kx, (B, Cin, H, W), dtype=jnp.float32)
    fan_in = Cin * 3 * 3
    weight = jax.random.normal(kw_, (Cout, Cin, 3, 3), dtype=jnp.float32) / math.sqrt(fan_in)
    bias = 0.1 * jax.random.normal(kb, (Cout,), dtype=jnp.float32)
    gamma = 1.0 + 0.1 * jax.random.normal(kg, (Cout,), dtype=jnp.float32)
    beta = 0.1 * jax.random.normal(kbt, (Cout,), dtype=jnp.float32)

    # 1) act = Identity (module default), single row tile per sample.
    y = jax.block_until_ready(conv_act_norm(x, weight, bias, gamma, beta))
    assert y.shape == (B, Cout, H - 2, W - 2), y.shape
    assert y.dtype == jnp.float32
    y_ref = conv_act_norm_reference(x, weight, bias, gamma, beta)
    err = float(jnp.max(jnp.abs(y - y_ref)))
    assert jnp.allclose(y, y_ref, atol=2e-3, rtol=2e-3), f"max|diff|={err}"

    # 2) act = ReLU, forced multi-row-tile path (exercises resident-block accumulation).
    H2 = W2 = 18
    x2 = jax.random.normal(kx, (B, Cin, H2, W2), dtype=jnp.float32)
    y2 = jax.block_until_ready(
        conv_act_norm(x2, weight, bias, gamma, beta, act=jax.nn.relu, max_row_tile=8))
    y2_ref = conv_act_norm_reference(x2, weight, bias, gamma, beta, act=jax.nn.relu)
    assert y2.shape == (B, Cout, H2 - 2, W2 - 2), y2.shape
    err2 = float(jnp.max(jnp.abs(y2 - y2_ref)))
    assert jnp.allclose(y2, y2_ref, atol=2e-3, rtol=2e-3), f"max|diff|={err2}"

    print("KERNEL_OK")
</pallas_src>

<mosaic_0001>
module attributes {stable_mosaic.version = 11 : i64} {
  func.func @kernel(%arg0: i32, %arg1: i32, %arg2: memref<1x4x16x16xf32, #tpu.memory_space<vmem>>, %arg3: memref<8x36xf32, #tpu.memory_space<vmem>>, %arg4: memref<8x1xf32, #tpu.memory_space<vmem>>, %arg5: memref<8x1xf32, #tpu.memory_space<vmem>>, %arg6: memref<8x1xf32, #tpu.memory_space<vmem>>, %arg7: memref<1x8x14x14xf32, #tpu.memory_space<vmem>>) attributes {dimension_semantics = [#tpu.dimension_semantics<parallel>, #tpu.dimension_semantics<arbitrary>], iteration_bounds = array<i64: 2, 1>, scalar_prefetch = 0 : i64, scratch_operands = 0 : i64, tpu.core_type = #tpu.core_type<tc>, window_params = [{transform_indices = @transform_0, window_bounds = array<i64: 1, 4, 16, 16>}, {pipeline_mode = #tpu.pipeline_mode<synchronous>, transform_indices = @transform_1, window_bounds = array<i64: 8, 36>}, {pipeline_mode = #tpu.pipeline_mode<synchronous>, transform_indices = @transform_2, window_bounds = array<i64: 8, 1>}, {pipeline_mode = #tpu.pipeline_mode<synchronous>, transform_indices = @transform_3, window_bounds = array<i64: 8, 1>}, {pipeline_mode = #tpu.pipeline_mode<synchronous>, transform_indices = @transform_4, window_bounds = array<i64: 8, 1>}, {transform_indices = @transform_5, window_bounds = array<i64: 1, 8, 14, 14>}]} {
    %c14_i32 = arith.constant 14 : i32
    %0 = arith.muli %arg1, %c14_i32 : i32
    %c0 = arith.constant 0 : index
    %c0_0 = arith.constant 0 : index
    %1 = arith.index_cast %0 : i32 to index
    %c0_1 = arith.constant 0 : index
    %2 = vector.load %arg2[%c0, %c0_0, %1, %c0_1] : memref<1x4x16x16xf32, #tpu.memory_space<vmem>>, vector<1x4x16x16xf32>
    %3 = vector.shape_cast %2 : vector<1x4x16x16xf32> to vector<4x16x16xf32>
    %4 = vector.extract_strided_slice %3 {offsets = [0, 0, 0], sizes = [4, 14, 16], strides = [1, 1, 1]} : vector<4x16x16xf32> to vector<4x14x16xf32>
    %5 = vector.extract_strided_slice %4 {offsets = [0, 0, 0], sizes = [4, 14, 14], strides = [1, 1, 1]} : vector<4x14x16xf32> to vector<4x14x14xf32>
    %6 = vector.extract_strided_slice %4 {offsets = [0, 0, 1], sizes = [4, 14, 14], strides = [1, 1, 1]} : vector<4x14x16xf32> to vector<4x14x14xf32>
    %7 = vector.extract_strided_slice %4 {offsets = [0, 0, 2], sizes = [4, 14, 14], strides = [1, 1, 1]} : vector<4x14x16xf32> to vector<4x14x14xf32>
    %8 = vector.extract_strided_slice %3 {offsets = [0, 1, 0], sizes = [4, 14, 16], strides = [1, 1, 1]} : vector<4x16x16xf32> to vector<4x14x16xf32>
    %9 = vector.extract_strided_slice %8 {offsets = [0, 0, 0], sizes = [4, 14, 14], strides = [1, 1, 1]} : vector<4x14x16xf32> to vector<4x14x14xf32>
    %10 = vector.extract_strided_slice %8 {offsets = [0, 0, 1], sizes = [4, 14, 14], strides = [1, 1, 1]} : vector<4x14x16xf32> to vector<4x14x14xf32>
    %11 = vector.extract_strided_slice %8 {offsets = [0, 0, 2], sizes = [4, 14, 14], strides = [1, 1, 1]} : vector<4x14x16xf32> to vector<4x14x14xf32>
    %12 = vector.extract_strided_slice %3 {offsets = [0, 2, 0], sizes = [4, 14, 16], strides = [1, 1, 1]} : vector<4x16x16xf32> to vector<4x14x16xf32>
    %13 = vector.extract_strided_slice %12 {offsets = [0, 0, 0], sizes = [4, 14, 14], strides = [1, 1, 1]} : vector<4x14x16xf32> to vector<4x14x14xf32>
    %14 = vector.extract_strided_slice %12 {offsets = [0, 0, 1], sizes = [4, 14, 14], strides = [1, 1, 1]} : vector<4x14x16xf32> to vector<4x14x14xf32>
    %15 = vector.extract_strided_slice %12 {offsets = [0, 0, 2], sizes = [4, 14, 14], strides = [1, 1, 1]} : vector<4x14x16xf32> to vector<4x14x14xf32>
    %16 = tpu.concatenate %5, %6, %7, %9, %10, %11, %13, %14, %15 in 0 : vector<4x14x14xf32>, vector<4x14x14xf32>, vector<4x14x14xf32>, vector<4x14x14xf32>, vector<4x14x14xf32>, vector<4x14x14xf32>, vector<4x14x14xf32>, vector<4x14x14xf32>, vector<4x14x14xf32> -> vector<36x14x14xf32>
    %17 = vector.shape_cast %16 : vector<36x14x14xf32> to vector<36x196xf32>
    %c0_2 = arith.constant 0 : index
    %c0_3 = arith.constant 0 : index
    %18 = vector.load %arg3[%c0_2, %c0_3] : memref<8x36xf32, #tpu.memory_space<vmem>>, vector<8x36xf32>
    %cst = arith.constant dense<0.000000e+00> : vector<8x196xf32>
    %19 = tpu.matmul %18, %17, %cst {dimension_numbers = #tpu.dot_dimension_numbers<[1], [0], [0], [1], [0, 0, 1, 1], [], []>} : vector<8x36xf32>, vector<36x196xf32>, vector<8x196xf32> -> vector<8x196xf32>
    %c0_4 = arith.constant 0 : index
    %c0_5 = arith.constant 0 : index
    %20 = vector.load %arg4[%c0_4, %c0_5] : memref<8x1xf32, #tpu.memory_space<vmem>>, vector<8x1xf32>
    %21 = vector.broadcast %20 : vector<8x1xf32> to vector<8x196xf32>
    %22 = arith.addf %19, %21 : vector<8x196xf32>
    %23 = vector.shape_cast %22 : vector<8x196xf32> to vector<8x14x14xf32>
    %c0_6 = arith.constant 0 : index
    %c0_7 = arith.constant 0 : index
    %24 = arith.index_cast %0 : i32 to index
    %c0_8 = arith.constant 0 : index
    %25 = vector.load %arg7[%c0_6, %c0_7, %24, %c0_8] : memref<1x8x14x14xf32, #tpu.memory_space<vmem>>, vector<1x8x14x14xf32>
    %26 = vector.shape_cast %25 : vector<1x8x14x14xf32> to vector<8x14x14xf32>
    %27 = vector.shape_cast %23 : vector<8x14x14xf32> to vector<1x8x14x14xf32>
    tpu.vector_store %arg7[%c0_6, %c0_7, %24, %c0_8], %27 {strides = array<i32>} : memref<1x8x14x14xf32, #tpu.memory_space<vmem>>, vector<1x8x14x14xf32>,
    %c0_i32 = arith.constant 0 : i32
    %28 = arith.cmpi eq, %arg1, %c0_i32 : i32
    %29 = arith.extui %28 : i1 to i32
    %c0_i32_9 = arith.constant 0 : i32
    %30 = arith.cmpi ne, %29, %c0_i32_9 : i32
    scf.if %30 {
      %c0_10 = arith.constant 0 : index
      %c0_11 = arith.constant 0 : index
      %c0_12 = arith.constant 0 : index
      %c0_13 = arith.constant 0 : index
      %31 = vector.load %arg7[%c0_10, %c0_11, %c0_12, %c0_13] : memref<1x8x14x14xf32, #tpu.memory_space<vmem>>, vector<1x8x14x14xf32>
      %32 = vector.shape_cast %31 : vector<1x8x14x14xf32> to vector<8x14x14xf32>
      %33 = vector.shape_cast %32 : vector<8x14x14xf32> to vector<1x8x14x14xf32>
      %cst_14 = arith.constant dense<0.000000e+00> : vector<1xf32>
      %34 = vector.multi_reduction <add>, %33, %cst_14 [1, 2, 3] : vector<1x8x14x14xf32> to vector<1xf32>
      %35 = vector.shape_cast %34 : vector<1xf32> to vector<1x1x1x1xf32>
      %36 = vector.extract %35[0, 0, 0, 0] : f32 from vector<1x1x1x1xf32>
      %37 = vector.broadcast %36 : f32 to vector<1x1x1xf32>
      %cst_15 = arith.constant 1.568000e+03 : f32
      %38 = vector.broadcast %cst_15 : f32 to vector<1x1x1xf32>
      %39 = arith.divf %37, %38 : vector<1x1x1xf32>
      %40 = vector.broadcast %39 : vector<1x1x1xf32> to vector<8x14x14xf32>
      %41 = arith.subf %32, %40 : vector<8x14x14xf32>
      %42 = arith.mulf %41, %41 : vector<8x14x14xf32>
      %43 = vector.shape_cast %42 : vector<8x14x14xf32> to vector<1x8x14x14xf32>
      %cst_16 = arith.constant dense<0.000000e+00> : vector<1xf32>
      %44 = vector.multi_reduction <add>, %43, %cst_16 [1, 2, 3] : vector<1x8x14x14xf32> to vector<1xf32>
      %45 = vector.shape_cast %44 : vector<1xf32> to vector<1x1x1x1xf32>
      %46 = vector.extract %45[0, 0, 0, 0] : f32 from vector<1x1x1x1xf32>
      %47 = vector.broadcast %46 : f32 to vector<1x1x1xf32>
      %cst_17 = arith.constant 1.568000e+03 : f32
      %48 = vector.broadcast %cst_17 : f32 to vector<1x1x1xf32>
      %49 = arith.divf %47, %48 : vector<1x1x1xf32>
      %cst_18 = arith.constant 9.99999974E-6 : f32
      %50 = vector.broadcast %cst_18 : f32 to vector<1x1x1xf32>
      %51 = arith.addf %49, %50 : vector<1x1x1xf32>
      %52 = math.rsqrt %51 : vector<1x1x1xf32>
      %c0_19 = arith.constant 0 : index
      %c0_20 = arith.constant 0 : index
      %53 = vector.load %arg5[%c0_19, %c0_20] : memref<8x1xf32, #tpu.memory_space<vmem>>, vector<8x1xf32>
      %54 = vector.shape_cast %53 : vector<8x1xf32> to vector<8x1x1xf32>
      %55 = vector.broadcast %52 : vector<1x1x1xf32> to vector<8x1x1xf32>
      %56 = arith.mulf %54, %55 : vector<8x1x1xf32>
      %c0_21 = arith.constant 0 : index
      %c0_22 = arith.constant 0 : index
      %57 = vector.load %arg6[%c0_21, %c0_22] : memref<8x1xf32, #tpu.memory_space<vmem>>, vector<8x1xf32>
      %58 = vector.shape_cast %57 : vector<8x1xf32> to vector<8x1x1xf32>
      %59 = vector.broadcast %56 : vector<8x1x1xf32> to vector<8x14x14xf32>
      %60 = arith.mulf %41, %59 : vector<8x14x14xf32>
      %61 = vector.broadcast %58 : vector<8x1x1xf32> to vector<8x14x14xf32>
      %62 = arith.addf %60, %61 : vector<8x14x14xf32>
      %c0_23 = arith.constant 0 : index
      %c0_24 = arith.constant 0 : index
      %c0_25 = arith.constant 0 : index
      %c0_26 = arith.constant 0 : index
      %63 = vector.load %arg7[%c0_23, %c0_24, %c0_25, %c0_26] : memref<1x8x14x14xf32, #tpu.memory_space<vmem>>, vector<1x8x14x14xf32>
      %64 = vector.shape_cast %63 : vector<1x8x14x14xf32> to vector<8x14x14xf32>
      %65 = vector.shape_cast %62 : vector<8x14x14xf32> to vector<1x8x14x14xf32>
      tpu.vector_store %arg7[%c0_23, %c0_24, %c0_25, %c0_26], %65 {strides = array<i32>} : memref<1x8x14x14xf32, #tpu.memory_space<vmem>>, vector<1x8x14x14xf32>,
    } else {
    }
    return
  }
  func.func @transform_0(%arg0: i32, %arg1: i32) -> (i32, i32, i32, i32) {
    %c0_i32 = arith.constant 0 : i32
    %c0_i32_0 = arith.constant 0 : i32
    %c0_i32_1 = arith.constant 0 : i32
    %c0_i32_2 = arith.constant 0 : i32
    return %arg0, %c0_i32, %c0_i32_0, %c0_i32_1 : i32, i32, i32, i32
  }
  func.func @transform_1(%arg0: i32, %arg1: i32) -> (i32, i32) {
    %c0_i32 = arith.constant 0 : i32
    %c0_i32_0 = arith.constant 0 : i32
    %c0_i32_1 = arith.constant 0 : i32
    return %c0_i32, %c0_i32_0 : i32, i32
  }
  func.func @transform_2(%arg0: i32, %arg1: i32) -> (i32, i32) {
    %c0_i32 = arith.constant 0 : i32
    %c0_i32_0 = arith.constant 0 : i32
    %c0_i32_1 = arith.constant 0 : i32
    return %c0_i32, %c0_i32_0 : i32, i32
  }
  func.func @transform_3(%arg0: i32, %arg1: i32) -> (i32, i32) {
    %c0_i32 = arith.constant 0 : i32
    %c0_i32_0 = arith.constant 0 : i32
    %c0_i32_1 = arith.constant 0 : i32
    return %c0_i32, %c0_i32_0 : i32, i32
  }
  func.func @transform_4(%arg0: i32, %arg1: i32) -> (i32, i32) {
    %c0_i32 = arith.constant 0 : i32
    %c0_i32_0 = arith.constant 0 : i32
    %c0_i32_1 = arith.constant 0 : i32
    return %c0_i32, %c0_i32_0 : i32, i32
  }
  func.func @transform_5(%arg0: i32, %arg1: i32) -> (i32, i32, i32, i32) {
    %c0_i32 = arith.constant 0 : i32
    %c0_i32_0 = arith.constant 0 : i32
    %c0_i32_1 = arith.constant 0 : i32
    %c0_i32_2 = arith.constant 0 : i32
    return %arg0, %c0_i32, %c0_i32_0, %c0_i32_1 : i32, i32, i32, i32
  }
}

</mosaic_0001>

<llo_original>
// kernel: tpu_custom_call.1
$region0: #{tpu_custom_call.1}
  #allocation0 [shape = 'u32[]', space=smem, size = 0x4, offset = 0x4, fixed_abs, tag = 'smem constant byte address 0x4 - core index']
  #allocation1 [shape = 'u32[144,128]{1,0:T(1,128)}', space=vmem, size = 0x12000, scoped, tag = 'internal scratch']
  %s0 = inlined_call_operand.hbm [shape: f32[2,4,16,16], index: 0, kind: input, shape index: {}]
  %s1 = inlined_call_operand.vmem [shape: f32[8,36], index: 1, kind: input, shape index: {}]
  %s2 = inlined_call_operand.vmem [shape: f32[8,1], index: 2, kind: input, shape index: {}]
  %s3 = inlined_call_operand.vmem [shape: f32[8,1], index: 3, kind: input, shape index: {}]
  %s4 = inlined_call_operand.vmem [shape: f32[8,1], index: 4, kind: input, shape index: {}]
  %s5 = inlined_call_operand.vmem [shape: f32[2,8,14,14], index: 5, kind: output, shape index: {}]
  %s6 = sld [smem:[#allocation0]]
  $region61: #{tpu_custom_call.1} parent=0
    _
  %s8 = ssub.s32 1, %s6
  %s9 = scalar_select 0, %s8, %s6
  $region1: #{tpu_custom_call.1} parent=0
    #allocation2 [shape = 'u8[65536]{0}', space=vmem, size = 0x10000, scoped, tag = 'input window, operand 0']
    #allocation3 [shape = 's32[2]{0}', space=sflag, size = 0x8, scoped, tag = 'scoped memory for tpu_custom_call.1']
    %10 = vsyncpa [#allocation3], 0
    %s11 = scalar_lea.sflag [#allocation3], 1
    %12 = vsyncpa %s11, 0
    loop: start=0, step=1, limit=4
    $region2: #{tpu_custom_call.1} parent=1 // loop_pre_header
      _
    $region3: #{tpu_custom_call.1} parent=1 // loop_header
      %s14 = sphi 0, %s18
      %p15 = scmp.ge.s32.totalorder %s14, 4
      %s21 = sphi 0, %s33
      %s22 = sphi 0, %s29
      %s23 = sphi 0, %s21
      %s24 = sphi 0, %s22
      %s25 = sphi 0, %s23
      %s26 = sphi 0, %s24
      %s36 = sphi 0, %s38
      %s39 = sphi 0, %s36
      %s40 = sphi 0, %s39
      %s56 = sphi 0, %s40
      %s60 = sphi 0, %s60
      %s62 = sphi 0, %s60
      %s63 = sphi 0, %s62
      %s77 = sphi 0, %s63
      %s81 = sphi 0, %s81
      %s83 = sphi 0, %s81
      %s84 = sphi 0, %s83
      %s98 = sphi 0, %s84
      %s102 = sphi 0, %s102
      %s104 = sphi 0, %s102
      %s105 = sphi 0, %s104
      %s119 = sphi 0, %s105
      %s123 = sphi 0, %s123
      %s125 = sphi 0, %s123
      %s126 = sphi 0, %s125
      %s140 = sphi 0, %s126
      %s146 = sphi 0, %s148
      %s149 = sphi 0, %s146
      %s150 = sphi 0, %s149
      %s166 = sphi 0, %s150
    $region4: #{tpu_custom_call.1} parent=1 // loop_header_branch
      %17 = sbr.rel (%p15) target = $region8
    $region5: #{tpu_custom_call.1} parent=1 // loop_body
      %s19 = ssub.s32 %s14, 1
      %s20 = ssub.s32 %s14, 2
      %s27 = sadd.s32 1, %s22
      %p28 = scmp.ge.s32.totalorder %s27, 1
      %s29 = scalar_select %p28, 0, %s27
      %s30 = sadd.s32 1, %s21
      %s31 = scalar_select %p28, %s30, %s21
      %p32 = scmp.ge.s32.totalorder %s31, 2
      %s33 = scalar_select %p32, 0, %s31
      %s34 = ssub.s32 %s21, %s33
      %p35 = scmp.eq.s32.totalorder %s34, 0
      %s37 = sadd.s32 %s36, 1
      %s38 = scalar_select %p35, %s36, %s37
      %p41 = pneg %p35
      %p42 = scmp.eq.s32.totalorder %s14, 1
      %p43 = por %p41, %p42
      %p44 = scmp.ne.s32.totalorder %s36, %s39
      %p45 = scmp.eq.s32.totalorder %s14, 0
      %p46 = por %p44, %p45
      %p47 = scmp.ne.s32.totalorder %s36, %s39
      %p48 = scmp.eq.s32.totalorder %s19, 1
      %p49 = por %p47, %p48
      %p50 = scmp.ne.s32.totalorder %s39, %s40
      %p51 = scmp.eq.s32.totalorder %s19, 0
      %p52 = por %p50, %p51
      %p53 = scmp.ne.s32.totalorder %s39, %s40
      %p54 = scmp.eq.s32.totalorder %s20, 1
      %p55 = por %p53, %p54
      %p57 = scmp.ne.s32.totalorder %s40, %s56
      %p58 = scmp.eq.s32.totalorder %s20, 0
      %p59 = por %p57, %p58
      %s61 = sadd.s32 %s60, 1
      %p64 = scmp.eq.s32.totalorder %s14, 1
      %p65 = scmp.ne.s32.totalorder %s60, %s62
      %p66 = scmp.eq.s32.totalorder %s14, 0
      %p67 = por %p65, %p66
      %p68 = scmp.ne.s32.totalorder %s60, %s62
      %p69 = scmp.eq.s32.totalorder %s19, 1
      %p70 = por %p68, %p69
      %p71 = scmp.ne.s32.totalorder %s62, %s63
      %p72 = scmp.eq.s32.totalorder %s19, 0
      %p73 = por %p71, %p72
      %p74 = scmp.ne.s32.totalorder %s62, %s63
      %p75 = scmp.eq.s32.totalorder %s20, 1
      %p76 = por %p74, %p75
      %p78 = scmp.ne.s32.totalorder %s63, %s77
      %p79 = scmp.eq.s32.totalorder %s20, 0
      %p80 = por %p78, %p79
      %s82 = sadd.s32 %s81, 1
      %p85 = scmp.eq.s32.totalorder %s14, 1
      %p86 = scmp.ne.s32.totalorder %s81, %s83
      %p87 = scmp.eq.s32.totalorder %s14, 0
      %p88 = por %p86, %p87
      %p89 = scmp.ne.s32.totalorder %s81, %s83
      %p90 = scmp.eq.s32.totalorder %s19, 1
      %p91 = por %p89, %p90
      %p92 = scmp.ne.s32.totalorder %s83, %s84
      %p93 = scmp.eq.s32.totalorder %s19, 0
      %p94 = por %p92, %p93
      %p95 = scmp.ne.s32.totalorder %s83, %s84
      %p96 = scmp.eq.s32.totalorder %s20, 1
      %p97 = por %p95, %p96
      %p99 = scmp.ne.s32.totalorder %s84, %s98
      %p100 = scmp.eq.s32.totalorder %s20, 0
      %p101 = por %p99, %p100
      %s103 = sadd.s32 %s102, 1
      %p106 = scmp.eq.s32.totalorder %s14, 1
      %p107 = scmp.ne.s32.totalorder %s102, %s104
      %p108 = scmp.eq.s32.totalorder %s14, 0
      %p109 = por %p107, %p108
      %p110 = scmp.ne.s32.totalorder %s102, %s104
      %p111 = scmp.eq.s32.totalorder %s19, 1
      %p112 = por %p110, %p111
      %p113 = scmp.ne.s32.totalorder %s104, %s105
      %p114 = scmp.eq.s32.totalorder %s19, 0
      %p115 = por %p113, %p114
      %p116 = scmp.ne.s32.totalorder %s104, %s105
      %p117 = scmp.eq.s32.totalorder %s20, 1
      %p118 = por %p116, %p117
      %p120 = scmp.ne.s32.totalorder %s105, %s119
      %p121 = scmp.eq.s32.totalorder %s20, 0
      %p122 = por %p120, %p121
      %s124 = sadd.s32 %s123, 1
      %p127 = scmp.eq.s32.totalorder %s14, 1
      %p128 = scmp.ne.s32.totalorder %s123, %s125
      %p129 = scmp.eq.s32.totalorder %s14, 0
      %p130 = por %p128, %p129
      %p131 = scmp.ne.s32.totalorder %s123, %s125
      %p132 = scmp.eq.s32.totalorder %s19, 1
      %p133 = por %p131, %p132
      %p134 = scmp.ne.s32.totalorder %s125, %s126
      %p135 = scmp.eq.s32.totalorder %s19, 0
      %p136 = por %p134, %p135
      %p137 = scmp.ne.s32.totalorder %s125, %s126
      %p138 = scmp.eq.s32.totalorder %s20, 1
      %p139 = por %p137, %p138
      %p141 = scmp.ne.s32.totalorder %s126, %s140
      %p142 = scmp.eq.s32.totalorder %s20, 0
      %p143 = por %p141, %p142
      %s144 = ssub.s32 %s21, %s33
      %p145 = scmp.eq.s32.totalorder %s144, 0
      %s147 = sadd.s32 %s146, 1
      %s148 = scalar_select %p145, %s146, %s147
      %p151 = pneg %p145
      %p152 = scmp.eq.s32.totalorder %s14, 1
      %p153 = por %p151, %p152
      %p154 = scmp.ne.s32.totalorder %s146, %s149
      %p155 = scmp.eq.s32.totalorder %s14, 0
      %p156 = por %p154, %p155
      %p157 = scmp.ne.s32.totalorder %s146, %s149
      %p158 = scmp.eq.s32.totalorder %s19, 1
      %p159 = por %p157, %p158
      %p160 = scmp.ne.s32.totalorder %s149, %s150
      %p161 = scmp.eq.s32.totalorder %s19, 0
      %p162 = por %p160, %p161
      %p163 = scmp.ne.s32.totalorder %s149, %s150
      %p164 = scmp.eq.s32.totalorder %s20, 1
      %p165 = por %p163, %p164
      %p167 = scmp.ne.s32.totalorder %s150, %s166
      %p168 = scmp.eq.s32.totalorder %s20, 0
      %p169 = por %p167, %p168
      %p170 = scmp.le.s32.totalorder 1, %s14
      %p171 = scmp.lt.s32.totalorder %s14, 3
      %p172 = pnand %p170, %p171
      %p173 = pneg %p172
      // Predicated region
      $region9: #{tpu_custom_call.1} parent=5 // pred_check
        _
      $region10: #{tpu_custom_call.1} parent=5 // pred_check_branch
        %175 = sbr.rel (%p172) target = $region12
      $region11: #{tpu_custom_call.1} parent=5 // pred_region
        %s176 = ssub.s32 %s14, 1
        // Predicated region
        $region13: #{tpu_custom_call.1} parent=11 // pred_check
          %p177 = pneg %p73
        $region14: #{tpu_custom_call.1} parent=11 // pred_check_branch
          %179 = sbr.rel (%p177) target = $region16
        $region15: #{tpu_custom_call.1} parent=11 // pred_region
          _
        $region16: #{tpu_custom_call.1} parent=11 // pred_fallthru
          _
        // Predicated region
        $region17: #{tpu_custom_call.1} parent=11 // pred_check
          %p180 = pneg %p94
        $region18: #{tpu_custom_call.1} parent=11 // pred_check_branch
          %182 = sbr.rel (%p180) target = $region20
        $region19: #{tpu_custom_call.1} parent=11 // pred_region
          _
        $region20: #{tpu_custom_call.1} parent=11 // pred_fallthru
          _
        // Predicated region
        $region21: #{tpu_custom_call.1} parent=11 // pred_check
          %p183 = pneg %p115
        $region22: #{tpu_custom_call.1} parent=11 // pred_check_branch
          %185 = sbr.rel (%p183) target = $region24
        $region23: #{tpu_custom_call.1} parent=11 // pred_region
          _
        $region24: #{tpu_custom_call.1} parent=11 // pred_fallthru
          _
        // Predicated region
        $region25: #{tpu_custom_call.1} parent=11 // pred_check
          %p186 = pneg %p136
        $region26: #{tpu_custom_call.1} parent=11 // pred_check_branch
          %188 = sbr.rel (%p186) target = $region28
        $region27: #{tpu_custom_call.1} parent=11 // pred_region
          _
        $region28: #{tpu_custom_call.1} parent=11 // pred_fallthru
          _
      $region12: #{tpu_custom_call.1} parent=5 // pred_fallthru
        _
      %p189 = scmp.lt.s32.totalorder %s14, 2
      // Predicated region
      $region29: #{tpu_custom_call.1} parent=5 // pred_check
        %p190 = pneg %p189
      $region30: #{tpu_custom_call.1} parent=5 // pred_check_branch
        %192 = sbr.rel (%p190) target = $region32
      $region31: #{tpu_custom_call.1} parent=5 // pred_region
        // Predicated region
        $region33: #{tpu_custom_call.1} parent=31 // pred_check
          %p193 = pneg %p46
        $region34: #{tpu_custom_call.1} parent=31 // pred_check_branch
          %195 = sbr.rel (%p193) target = $region36
        $region35: #{tpu_custom_call.1} parent=31 // pred_region
          %s196 = sand.u32 %s36, 1
          %s197 = scalar_lea.sflag [#allocation3], %s196
          %s198 = sand.u32 %s36, 1
          %s199 = smul.addr %s198, 64
          %s200 = scalar_lea.vmem [#allocation2], %s199
          %s202 = ssub.s32 1024, 1024
          %203 = vsyncadd %s197, %s202
          %s204 = smul.addr %s21, 8
          %s205 = smul.addr %s204, 128
          %s206 = scalar_lea.hbm %s0, %s205
          %s207 = sshll.u32 %s200, 4
          %s208 = int_to_ptr.vmem [resolvable:$true] %s207
          %213 = dma.hbm_to_vmem [thread:$0]  %s206, 1024, %s208, %s197, 128, 128, 8
        $region36: #{tpu_custom_call.1} parent=31 // pred_fallthru
          _
      $region32: #{tpu_custom_call.1} parent=5 // pred_fallthru
        _
      %p214 = scmp.le.s32.totalorder 1, %s14
      %p215 = scmp.lt.s32.totalorder %s14, 3
      %p216 = pnand %p214, %p215
      %p217 = pneg %p216
      // Predicated region
      $region37: #{tpu_custom_call.1} parent=5 // pred_check
        _
      $region38: #{tpu_custom_call.1} parent=5 // pred_check_branch
        %219 = sbr.rel (%p216) target = $region40
      $region39: #{tpu_custom_call.1} parent=5 // pred_region
        %s220 = ssub.s32 %s14, 1
        %s221 = sand.u32 %s39, 1
        %s222 = scalar_lea.sflag [#allocation3], %s221
        %s223 = sand.u32 %s39, 1
        %s224 = smul.addr %s223, 64
        %s225 = scalar_lea.vmem [#allocation2], %s224
        // Predicated region
        $region41: #{tpu_custom_call.1} parent=39 // pred_check
          %p226 = pneg %p52
        $region42: #{tpu_custom_call.1} parent=39 // pred_check_branch
          %228 = sbr.rel (%p226) target = $region44
        $region43: #{tpu_custom_call.1} parent=39 // pred_region
          %229 = dma.done %s222, 1024
        $region44: #{tpu_custom_call.1} parent=39 // pred_fallthru
          _
        %s230 = sand.u32 %s39, 1
        %s231 = scalar_lea.sflag [#allocation3], %s230
        %s232 = sand.u32 %s39, 1
        %s233 = smul.addr %s232, 64
        %s234 = scalar_lea.vmem [#allocation2], %s233
        %p235 = pneg %p52
        %p236 = pneg %p49
        %p237 = pneg %p73
        %p238 = pneg %p70
        %p239 = pneg %p94
        %p240 = pneg %p91
        %p241 = pneg %p115
        %p242 = pneg %p112
        %p243 = pneg %p136
        %p244 = pneg %p133
        %p245 = pneg %p162
        %p246 = pneg %p159
        %p247 = scmp.lt.s32.totalorder %s23, 1
        %s248 = scalar_select %p247, %s23, 1
        %s249 = smul.addr %s248, 16
        %s250 = smul.addr %s249, 8
        %s251 = scalar_lea.vmem %s5, %s250
        %p252 = scmp.lt.s32.totalorder %s23, 1
        %s253 = scalar_select %p252, %s23, 1
        %s254 = smul.addr %s253, 16
        %s255 = smul.addr %s254, 8
        %s256 = scalar_lea.vmem %s5, %s255
        %s257 = smul.u32 %s24, 14
        %s258 = scalar_lea.vmem %s225, %s257 [#allocation2]
        %v259 = vld [vmem:[%s258] sm:$0xff]
        %v260 = vld [vmem:[%s258 + $0x8] sm:$0xff]
        %v261 = vld [vmem:[%s258 + $0x10] sm:$0xff]
        %v262 = vld [vmem:[%s258 + $0x18] sm:$0xff]
        %v263 = vld [vmem:[%s258 + $0x20] sm:$0xff]
        %v264 = vld [vmem:[%s258 + $0x28] sm:$0xff]
        %v265 = vld [vmem:[%s258 + $0x30] sm:$0xff]
        %v266 = vld [vmem:[%s258 + $0x38] sm:$0xff]
        %275 = vrot.lane.b32.xlu0 %v259, 127
        %v276 = vpop.permute.xlu0 %275
        %277 = vrot.lane.b32.xlu0 %v260, 127
        %v278 = vpop.permute.xlu0 %277
        %279 = vrot.lane.b32.xlu0 %v261, 127
        %v280 = vpop.permute.xlu0 %279
        %281 = vrot.lane.b32.xlu0 %v262, 127
        %v282 = vpop.permute.xlu0 %281
        %283 = vrot.lane.b32.xlu0 %v263, 127
        %v284 = vpop.permute.xlu0 %283
        %285 = vrot.lane.b32.xlu0 %v264, 127
        %v286 = vpop.permute.xlu0 %285
        %287 = vrot.lane.b32.xlu0 %v265, 127
        %v288 = vpop.permute.xlu0 %287
        %289 = vrot.lane.b32.xlu0 %v266, 127
        %v290 = vpop.permute.xlu0 %289
        %299 = vrot.lane.b32.xlu0 %v259, 126
        %v300 = vpop.permute.xlu0 %299
        %301 = vrot.lane.b32.xlu0 %v260, 126
        %v302 = vpop.permute.xlu0 %301
        %303 = vrot.lane.b32.xlu0 %v261, 126
        %v304 = vpop.permute.xlu0 %303
        %305 = vrot.lane.b32.xlu0 %v262, 126
        %v306 = vpop.permute.xlu0 %305
        %307 = vrot.lane.b32.xlu0 %v263, 126
        %v308 = vpop.permute.xlu0 %307
        %309 = vrot.lane.b32.xlu0 %v264, 126
        %v310 = vpop.permute.xlu0 %309
        %311 = vrot.lane.b32.xlu0 %v265, 126
        %v312 = vpop.permute.xlu0 %311
        %313 = vrot.lane.b32.xlu0 %v266, 126
        %v314 = vpop.permute.xlu0 %313
        %vm323 = vcmask 1046528
        %v324 = vrot.slane %v259, 1
        %v325 = vrot.slane %v260, 1
        %v326 = vsel %vm323, %v324, %v325
        %v327 = vrot.slane %v261, 1
        %v328 = vrot.slane %v262, 1
        %v329 = vsel %vm323, %v327, %v328
        %v330 = vrot.slane %v263, 1
        %v331 = vrot.slane %v264, 1
        %v332 = vsel %vm323, %v330, %v331
        %v333 = vrot.slane %v265, 1
        %v334 = vrot.slane %v266, 1
        %v335 = vsel %vm323, %v333, %v334
        %344 = vrot.lane.b32.xlu0 %v326, 127
        %v345 = vpop.permute.xlu0 %344
        %346 = vrot.lane.b32.xlu0 %v325, 127
        %v347 = vpop.permute.xlu0 %346
        %348 = vrot.lane.b32.xlu0 %v329, 127
        %v349 = vpop.permute.xlu0 %348
        %350 = vrot.lane.b32.xlu0 %v328, 127
        %v351 = vpop.permute.xlu0 %350
        %352 = vrot.lane.b32.xlu0 %v332, 127
        %v353 = vpop.permute.xlu0 %352
        %354 = vrot.lane.b32.xlu0 %v331, 127
        %v355 = vpop.permute.xlu0 %354
        %356 = vrot.lane.b32.xlu0 %v335, 127
        %v357 = vpop.permute.xlu0 %356
        %358 = vrot.lane.b32.xlu0 %v334, 127
        %v359 = vpop.permute.xlu0 %358
        %368 = vrot.lane.b32.xlu0 %v326, 126
        %v369 = vpop.permute.xlu0 %368
        %370 = vrot.lane.b32.xlu0 %v325, 126
        %v371 = vpop.permute.xlu0 %370
        %372 = vrot.lane.b32.xlu0 %v329, 126
        %v373 = vpop.permute.xlu0 %372
        %374 = vrot.lane.b32.xlu0 %v328, 126
        %v375 = vpop.permute.xlu0 %374
        %376 = vrot.lane.b32.xlu0 %v332, 126
        %v377 = vpop.permute.xlu0 %376
        %378 = vrot.lane.b32.xlu0 %v331, 126
        %v379 = vpop.permute.xlu0 %378
        %380 = vrot.lane.b32.xlu0 %v335, 126
        %v381 = vpop.permute.xlu0 %380
        %382 = vrot.lane.b32.xlu0 %v334, 126
        %v383 = vpop.permute.xlu0 %382
        %vm392 = vcmask 1045504
        %v393 = vrot.slane %v259, 2
        %v394 = vrot.slane %v260, 2
        %v395 = vsel %vm392, %v393, %v394
        %v396 = vrot.slane %v261, 2
        %v397 = vrot.slane %v262, 2
        %v398 = vsel %vm392, %v396, %v397
        %v399 = vrot.slane %v263, 2
        %v400 = vrot.slane %v264, 2
        %v401 = vsel %vm392, %v399, %v400
        %v402 = vrot.slane %v265, 2
        %v403 = vrot.slane %v266, 2
        %v404 = vsel %vm392, %v402, %v403
        %413 = vrot.lane.b32.xlu0 %v395, 127
        %v414 = vpop.permute.xlu0 %413
        %415 = vrot.lane.b32.xlu0 %v394, 127
        %v416 = vpop.permute.xlu0 %415
        %417 = vrot.lane.b32.xlu0 %v398, 127
        %v418 = vpop.permute.xlu0 %417
        %419 = vrot.lane.b32.xlu0 %v397, 127
        %v420 = vpop.permute.xlu0 %419
        %421 = vrot.lane.b32.xlu0 %v401, 127
        %v422 = vpop.permute.xlu0 %421
        %423 = vrot.lane.b32.xlu0 %v400, 127
        %v424 = vpop.permute.xlu0 %423
        %425 = vrot.lane.b32.xlu0 %v404, 127
        %v426 = vpop.permute.xlu0 %425
        %427 = vrot.lane.b32.xlu0 %v403, 127
        %v428 = vpop.permute.xlu0 %427
        %437 = vrot.lane.b32.xlu0 %v395, 126
        %v438 = vpop.permute.xlu0 %437
        %439 = vrot.lane.b32.xlu0 %v394, 126
        %v440 = vpop.permute.xlu0 %439
        %441 = vrot.lane.b32.xlu0 %v398, 126
        %v442 = vpop.permute.xlu0 %441
        %443 = vrot.lane.b32.xlu0 %v397, 126
        %v444 = vpop.permute.xlu0 %443
        %445 = vrot.lane.b32.xlu0 %v401, 126
        %v446 = vpop.permute.xlu0 %445
        %447 = vrot.lane.b32.xlu0 %v400, 126
        %v448 = vpop.permute.xlu0 %447
        %449 = vrot.lane.b32.xlu0 %v404, 126
        %v450 = vpop.permute.xlu0 %449
        %451 = vrot.lane.b32.xlu0 %v403, 126
        %v452 = vpop.permute.xlu0 %451
        %v461 = vcombine.low %v259, %v263
        %v462 = vcombine.high %v259, %v263
        %v464 = vunpack.c.l.s4 1983009808
        %v465 = vunpack.c.0.s8 %v464
        %v466 = vlaneseq
        %v467 = vshrl.u32 %v466, 7
        %v468 = vsub.s32 %v465, %v467
        %v469 = vrot.slane %v461, %v468
        %v471 = vunpack.c.l.s4 1983009808
        %v472 = vunpack.c.0.s8 %v471
        %v473 = vlaneseq
        %v474 = vshrl.u32 %v473, 7
        %v475 = vsub.s32 %v472, %v474
        %v476 = vrot.slane %v462, %v475
        %v477 = vcombine.low %v261, %v265
        %v478 = vcombine.high %v261, %v265
        %v480 = vunpack.c.l.s4 1983009808
        %v481 = vunpack.c.0.s8 %v480
        %v482 = vlaneseq
        %v483 = vshrl.u32 %v482, 7
        %v484 = vsub.s32 %v481, %v483
        %v485 = vrot.slane %v477, %v484
        %v487 = vunpack.c.l.s4 1983009808
        %v488 = vunpack.c.0.s8 %v487
        %v489 = vlaneseq
        %v490 = vshrl.u32 %v489, 7
        %v491 = vsub.s32 %v488, %v490
        %v492 = vrot.slane %v478, %v491
        %v493 = vcombine.low %v276, %v284
        %v494 = vcombine.high %v276, %v284
        %v496 = vunpack.c.l.s4 1983009808
        %v497 = vunpack.c.0.s8 %v496
        %v498 = vlaneseq
        %v499 = vshrl.u32 %v498, 7
        %v500 = vsub.s32 %v497, %v499
        %v501 = vrot.slane %v493, %v500
        %v503 = vunpack.c.l.s4 1983009808
        %v504 = vunpack.c.0.s8 %v503
        %v505 = vlaneseq
        %v506 = vshrl.u32 %v505, 7
        %v507 = vsub.s32 %v504, %v506
        %v508 = vrot.slane %v494, %v507
        %v509 = vcombine.low %v280, %v288
        %v510 = vcombine.high %v280, %v288
        %v512 = vunpack.c.l.s4 1983009808
        %v513 = vunpack.c.0.s8 %v512
        %v514 = vlaneseq
        %v515 = vshrl.u32 %v514, 7
        %v516 = vsub.s32 %v513, %v515
        %v517 = vrot.slane %v509, %v516
        %v519 = vunpack.c.l.s4 1983009808
        %v520 = vunpack.c.0.s8 %v519
        %v521 = vlaneseq
        %v522 = vshrl.u32 %v521, 7
        %v523 = vsub.s32 %v520, %v522
        %v524 = vrot.slane %v510, %v523
        %v525 = vcombine.low %v469, %v485
        %v526 = vcombine.high %v469, %v485
        %v528 = vunpack.c.l.s4 1934713408
        %v529 = vunpack.c.0.s8 %v528
        %v530 = vlaneseq
        %v531 = vshrl.u32 %v530, 7
        %v532 = vsub.s32 %v529, %v531
        %v533 = vrot.slane %v525, %v532
        %v535 = vunpack.c.l.s4 1934713408
        %v536 = vunpack.c.0.s8 %v535
        %v537 = vlaneseq
        %v538 = vshrl.u32 %v537, 7
        %v539 = vsub.s32 %v536, %v538
        %v540 = vrot.slane %v526, %v539
        %v541 = vcombine.low %v476, %v492
        %v542 = vcombine.high %v476, %v492
        %v544 = vunpack.c.l.s4 1934713408
        %v545 = vunpack.c.0.s8 %v544
        %v546 = vlaneseq
        %v547 = vshrl.u32 %v546, 7
        %v548 = vsub.s32 %v545, %v547
        %v549 = vrot.slane %v541, %v548
        %v551 = vunpack.c.l.s4 1934713408
        %v552 = vunpack.c.0.s8 %v551
        %v553 = vlaneseq
        %v554 = vshrl.u32 %v553, 7
        %v555 = vsub.s32 %v552, %v554
        %v556 = vrot.slane %v542, %v555
        %v557 = vcombine.low %v501, %v517
        %v558 = vcombine.high %v501, %v517
        %v560 = vunpack.c.l.s4 1934713408
        %v561 = vunpack.c.0.s8 %v560
        %v562 = vlaneseq
        %v563 = vshrl.u32 %v562, 7
        %v564 = vsub.s32 %v561, %v563
        %v565 = vrot.slane %v557, %v564
        %v567 = vunpack.c.l.s4 1934713408
        %v568 = vunpack.c.0.s8 %v567
        %v569 = vlaneseq
        %v570 = vshrl.u32 %v569, 7
        %v571 = vsub.s32 %v568, %v570
        %v572 = vrot.slane %v558, %v571
        %v573 = vcombine.low %v508, %v524
        %v574 = vcombine.high %v508, %v524
        %v576 = vunpack.c.l.s4 1934713408
        %v577 = vunpack.c.0.s8 %v576
        %v578 = vlaneseq
        %v579 = vshrl.u32 %v578, 7
        %v580 = vsub.s32 %v577, %v579
        %v581 = vrot.slane %v573, %v580
        %v583 = vunpack.c.l.s4 1934713408
        %v584 = vunpack.c.0.s8 %v583
        %v585 = vlaneseq
        %v586 = vshrl.u32 %v585, 7
        %v587 = vsub.s32 %v584, %v586
        %v588 = vrot.slane %v574, %v587
        %v589 = vcombine.low %v533, %v565
        %v590 = vcombine.high %v533, %v565
        %v591 = vcombine.low %v540, %v572
        %v592 = vcombine.high %v540, %v572
        %v593 = vcombine.low %v549, %v581
        %v594 = vcombine.high %v549, %v581
        %v595 = vcombine.low %v556, %v588
        %v596 = vcombine.high %v556, %v588
        %v597 = vcombine.low %v300, %v308
        %v598 = vcombine.high %v300, %v308
        %v600 = vunpack.c.l.s4 1983009808
        %v601 = vunpack.c.0.s8 %v600
        %v602 = vlaneseq
        %v603 = vshrl.u32 %v602, 7
        %v604 = vsub.s32 %v601, %v603
        %v605 = vrot.slane %v597, %v604
        %v607 = vunpack.c.l.s4 1983009808
        %v608 = vunpack.c.0.s8 %v607
        %v609 = vlaneseq
        %v610 = vshrl.u32 %v609, 7
        %v611 = vsub.s32 %v608, %v610
        %v612 = vrot.slane %v598, %v611
        %v613 = vcombine.low %v304, %v312
        %v614 = vcombine.high %v304, %v312
        %v616 = vunpack.c.l.s4 1983009808
        %v617 = vunpack.c.0.s8 %v616
        %v618 = vlaneseq
        %v619 = vshrl.u32 %v618, 7
        %v620 = vsub.s32 %v617, %v619
        %v621 = vrot.slane %v613, %v620
        %v623 = vunpack.c.l.s4 1983009808
        %v624 = vunpack.c.0.s8 %v623
        %v625 = vlaneseq
        %v626 = vshrl.u32 %v625, 7
        %v627 = vsub.s32 %v624, %v626
        %v628 = vrot.slane %v614, %v627
        %v629 = vcombine.low %v326, %v332
        %v630 = vcombine.high %v326, %v332
        %v632 = vunpack.c.l.s4 1983009808
        %v633 = vunpack.c.0.s8 %v632
        %v634 = vlaneseq
        %v635 = vshrl.u32 %v634, 7
        %v636 = vsub.s32 %v633, %v635
        %v637 = vrot.slane %v629, %v636
        %v639 = vunpack.c.l.s4 1983009808
        %v640 = vunpack.c.0.s8 %v639
        %v641 = vlaneseq
        %v642 = vshrl.u32 %v641, 7
        %v643 = vsub.s32 %v640, %v642
        %v644 = vrot.slane %v630, %v643
        %v645 = vcombine.low %v329, %v335
        %v646 = vcombine.high %v329, %v335
        %v648 = vunpack.c.l.s4 1983009808
        %v649 = vunpack.c.0.s8 %v648
        %v650 = vlaneseq
        %v651 = vshrl.u32 %v650, 7
        %v652 = vsub.s32 %v649, %v651
        %v653 = vrot.slane %v645, %v652
        %v655 = vunpack.c.l.s4 1983009808
        %v656 = vunpack.c.0.s8 %v655
        %v657 = vlaneseq
        %v658 = vshrl.u32 %v657, 7
        %v659 = vsub.s32 %v656, %v658
        %v660 = vrot.slane %v646, %v659
        %v661 = vcombine.low %v605, %v621
        %v662 = vcombine.high %v605, %v621
        %v664 = vunpack.c.l.s4 1934713408
        %v665 = vunpack.c.0.s8 %v664
        %v666 = vlaneseq
        %v667 = vshrl.u32 %v666, 7
        %v668 = vsub.s32 %v665, %v667
        %v669 = vrot.slane %v661, %v668
        %v671 = vunpack.c.l.s4 1934713408
        %v672 = vunpack.c.0.s8 %v671
        %v673 = vlaneseq
        %v674 = vshrl.u32 %v673, 7
        %v675 = vsub.s32 %v672, %v674
        %v676 = vrot.slane %v662, %v675
        %v677 = vcombine.low %v612, %v628
        %v678 = vcombine.high %v612, %v628
        %v680 = vunpack.c.l.s4 1934713408
        %v681 = vunpack.c.0.s8 %v680
        %v682 = vlaneseq
        %v683 = vshrl.u32 %v682, 7
        %v684 = vsub.s32 %v681, %v683
        %v685 = vrot.slane %v677, %v684
        %v687 = vunpack.c.l.s4 1934713408
        %v688 = vunpack.c.0.s8 %v687
        %v689 = vlaneseq
        %v690 = vshrl.u32 %v689, 7
        %v691 = vsub.s32 %v688, %v690
        %v692 = vrot.slane %v678, %v691
        %v693 = vcombine.low %v637, %v653
        %v694 = vcombine.high %v637, %v653
        %v696 = vunpack.c.l.s4 1934713408
        %v697 = vunpack.c.0.s8 %v696
        %v698 = vlaneseq
        %v699 = vshrl.u32 %v698, 7
        %v700 = vsub.s32 %v697, %v699
        %v701 = vrot.slane %v693, %v700
        %v703 = vunpack.c.l.s4 1934713408
        %v704 = vunpack.c.0.s8 %v703
        %v705 = vlaneseq
        %v706 = vshrl.u32 %v705, 7
        %v707 = vsub.s32 %v704, %v706
        %v708 = vrot.slane %v694, %v707
        %v709 = vcombine.low %v644, %v660
        %v710 = vcombine.high %v644, %v660
        %v712 = vunpack.c.l.s4 1934713408
        %v713 = vunpack.c.0.s8 %v712
        %v714 = vlaneseq
        %v715 = vshrl.u32 %v714, 7
        %v716 = vsub.s32 %v713, %v715
        %v717 = vrot.slane %v709, %v716
        %v719 = vunpack.c.l.s4 1934713408
        %v720 = vunpack.c.0.s8 %v719
        %v721 = vlaneseq
        %v722 = vshrl.u32 %v721, 7
        %v723 = vsub.s32 %v720, %v722
        %v724 = vrot.slane %v710, %v723
        %v725 = vcombine.low %v669, %v701
        %v726 = vcombine.high %v669, %v701
        %v727 = vcombine.low %v676, %v708
        %v728 = vcombine.high %v676, %v708
        %v729 = vcombine.low %v685, %v717
        %v730 = vcombine.high %v685, %v717
        %v731 = vcombine.low %v692, %v724
        %v732 = vcombine.high %v692, %v724
        %v733 = vcombine.low %v345, %v353
        %v734 = vcombine.high %v345, %v353
        %v736 = vunpack.c.l.s4 1983009808
        %v737 = vunpack.c.0.s8 %v736
        %v738 = vlaneseq
        %v739 = vshrl.u32 %v738, 7
        %v740 = vsub.s32 %v737, %v739
        %v741 = vrot.slane %v733, %v740
        %v743 = vunpack.c.l.s4 1983009808
        %v744 = vunpack.c.0.s8 %v743
        %v745 = vlaneseq
        %v746 = vshrl.u32 %v745, 7
        %v747 = vsub.s32 %v744, %v746
        %v748 = vrot.slane %v734, %v747
        %v749 = vcombine.low %v349, %v357
        %v750 = vcombine.high %v349, %v357
        %v752 = vunpack.c.l.s4 1983009808
        %v753 = vunpack.c.0.s8 %v752
        %v754 = vlaneseq
        %v755 = vshrl.u32 %v754, 7
        %v756 = vsub.s32 %v753, %v755
        %v757 = vrot.slane %v749, %v756
        %v759 = vunpack.c.l.s4 1983009808
        %v760 = vunpack.c.0.s8 %v759
        %v761 = vlaneseq
        %v762 = vshrl.u32 %v761, 7
        %v763 = vsub.s32 %v760, %v762
        %v764 = vrot.slane %v750, %v763
        %v765 = vcombine.low %v369, %v377
        %v766 = vcombine.high %v369, %v377
        %v768 = vunpack.c.l.s4 1983009808
        %v769 = vunpack.c.0.s8 %v768
        %v770 = vlaneseq
        %v771 = vshrl.u32 %v770, 7
        %v772 = vsub.s32 %v769, %v771
        %v773 = vrot.slane %v765, %v772
        %v775 = vunpack.c.l.s4 1983009808
        %v776 = vunpack.c.0.s8 %v775
        %v777 = vlaneseq
        %v778 = vshrl.u32 %v777, 7
        %v779 = vsub.s32 %v776, %v778
        %v780 = vrot.slane %v766, %v779
        %v781 = vcombine.low %v373, %v381
        %v782 = vcombine.high %v373, %v381
        %v784 = vunpack.c.l.s4 1983009808
        %v785 = vunpack.c.0.s8 %v784
        %v786 = vlaneseq
        %v787 = vshrl.u32 %v786, 7
        %v788 = vsub.s32 %v785, %v787
        %v789 = vrot.slane %v781, %v788
        %v791 = vunpack.c.l.s4 1983009808
        %v792 = vunpack.c.0.s8 %v791
        %v793 = vlaneseq
        %v794 = vshrl.u32 %v793, 7
        %v795 = vsub.s32 %v792, %v794
        %v796 = vrot.slane %v782, %v795
        %v797 = vcombine.low %v741, %v757
        %v798 = vcombine.high %v741, %v757
        %v800 = vunpack.c.l.s4 1934713408
        %v801 = vunpack.c.0.s8 %v800
        %v802 = vlaneseq
        %v803 = vshrl.u32 %v802, 7
        %v804 = vsub.s32 %v801, %v803
        %v805 = vrot.slane %v797, %v804
        %v807 = vunpack.c.l.s4 1934713408
        %v808 = vunpack.c.0.s8 %v807
        %v809 = vlaneseq
        %v810 = vshrl.u32 %v809, 7
        %v811 = vsub.s32 %v808, %v810
        %v812 = vrot.slane %v798, %v811
        %v813 = vcombine.low %v748, %v764
        %v814 = vcombine.high %v748, %v764
        %v816 = vunpack.c.l.s4 1934713408
        %v817 = vunpack.c.0.s8 %v816
        %v818 = vlaneseq
        %v819 = vshrl.u32 %v818, 7
        %v820 = vsub.s32 %v817, %v819
        %v821 = vrot.slane %v813, %v820
        %v823 = vunpack.c.l.s4 1934713408
        %v824 = vunpack.c.0.s8 %v823
        %v825 = vlaneseq
        %v826 = vshrl.u32 %v825, 7
        %v827 = vsub.s32 %v824, %v826
        %v828 = vrot.slane %v814, %v827
        %v829 = vcombine.low %v773, %v789
        %v830 = vcombine.high %v773, %v789
        %v832 = vunpack.c.l.s4 1934713408
        %v833 = vunpack.c.0.s8 %v832
        %v834 = vlaneseq
        %v835 = vshrl.u32 %v834, 7
        %v836 = vsub.s32 %v833, %v835
        %v837 = vrot.slane %v829, %v836
        %v839 = vunpack.c.l.s4 1934713408
        %v840 = vunpack.c.0.s8 %v839
        %v841 = vlaneseq
        %v842 = vshrl.u32 %v841, 7
        %v843 = vsub.s32 %v840, %v842
        %v844 = vrot.slane %v830, %v843
        %v845 = vcombine.low %v780, %v796
        %v846 = vcombine.high %v780, %v796
        %v848 = vunpack.c.l.s4 1934713408
        %v849 = vunpack.c.0.s8 %v848
        %v850 = vlaneseq
        %v851 = vshrl.u32 %v850, 7
        %v852 = vsub.s32 %v849, %v851
        %v853 = vrot.slane %v845, %v852
        %v855 = vunpack.c.l.s4 1934713408
        %v856 = vunpack.c.0.s8 %v855
        %v857 = vlaneseq
        %v858 = vshrl.u32 %v857, 7
        %v859 = vsub.s32 %v856, %v858
        %v860 = vrot.slane %v846, %v859
        %v861 = vcombine.low %v805, %v837
        %v862 = vcombine.high %v805, %v837
        %v863 = vcombine.low %v812, %v844
        %v864 = vcombine.high %v812, %v844
        %v865 = vcombine.low %v821, %v853
        %v866 = vcombine.high %v821, %v853
        %v867 = vcombine.low %v828, %v860
        %v868 = vcombine.high %v828, %v860
        %v869 = vcombine.low %v395, %v401
        %v870 = vcombine.high %v395, %v401
        %v872 = vunpack.c.l.s4 1983009808
        %v873 = vunpack.c.0.s8 %v872
        %v874 = vlaneseq
        %v875 = vshrl.u32 %v874, 7
        %v876 = vsub.s32 %v873, %v875
        %v877 = vrot.slane %v869, %v876
        %v879 = vunpack.c.l.s4 1983009808
        %v880 = vunpack.c.0.s8 %v879
        %v881 = vlaneseq
        %v882 = vshrl.u32 %v881, 7
        %v883 = vsub.s32 %v880, %v882
        %v884 = vrot.slane %v870, %v883
        %v885 = vcombine.low %v398, %v404
        %v886 = vcombine.high %v398, %v404
        %v888 = vunpack.c.l.s4 1983009808
        %v889 = vunpack.c.0.s8 %v888
        %v890 = vlaneseq
        %v891 = vshrl.u32 %v890, 7
        %v892 = vsub.s32 %v889, %v891
        %v893 = vrot.slane %v885, %v892
        %v895 = vunpack.c.l.s4 1983009808
        %v896 = vunpack.c.0.s8 %v895
        %v897 = vlaneseq
        %v898 = vshrl.u32 %v897, 7
        %v899 = vsub.s32 %v896, %v898
        %v900 = vrot.slane %v886, %v899
        %v901 = vcombine.low %v414, %v422
        %v902 = vcombine.high %v414, %v422
        %v904 = vunpack.c.l.s4 1983009808
        %v905 = vunpack.c.0.s8 %v904
        %v906 = vlaneseq
        %v907 = vshrl.u32 %v906, 7
        %v908 = vsub.s32 %v905, %v907
        %v909 = vrot.slane %v901, %v908
        %v911 = vunpack.c.l.s4 1983009808
        %v912 = vunpack.c.0.s8 %v911
        %v913 = vlaneseq
        %v914 = vshrl.u32 %v913, 7
        %v915 = vsub.s32 %v912, %v914
        %v916 = vrot.slane %v902, %v915
        %v917 = vcombine.low %v418, %v426
        %v918 = vcombine.high %v418, %v426
        %v920 = vunpack.c.l.s4 1983009808
        %v921 = vunpack.c.0.s8 %v920
        %v922 = vlaneseq
        %v923 = vshrl.u32 %v922, 7
        %v924 = vsub.s32 %v921, %v923
        %v925 = vrot.slane %v917, %v924
        %v927 = vunpack.c.l.s4 1983009808
        %v928 = vunpack.c.0.s8 %v927
        %v929 = vlaneseq
        %v930 = vshrl.u32 %v929, 7
        %v931 = vsub.s32 %v928, %v930
        %v932 = vrot.slane %v918, %v931
        %v933 = vcombine.low %v877, %v893
        %v934 = vcombine.high %v877, %v893
        %v936 = vunpack.c.l.s4 1934713408
        %v937 = vunpack.c.0.s8 %v936
        %v938 = vlaneseq
        %v939 = vshrl.u32 %v938, 7
        %v940 = vsub.s32 %v937, %v939
        %v941 = vrot.slane %v933, %v940
        %v943 = vunpack.c.l.s4 1934713408
        %v944 = vunpack.c.0.s8 %v943
        %v945 = vlaneseq
        %v946 = vshrl.u32 %v945, 7
        %v947 = vsub.s32 %v944, %v946
        %v948 = vrot.slane %v934, %v947
        %v949 = vcombine.low %v884, %v900
        %v950 = vcombine.high %v884, %v900
        %v952 = vunpack.c.l.s4 1934713408
        %v953 = vunpack.c.0.s8 %v952
        %v954 = vlaneseq
        %v955 = vshrl.u32 %v954, 7
        %v956 = vsub.s32 %v953, %v955
        %v957 = vrot.slane %v949, %v956
        %v959 = vunpack.c.l.s4 1934713408
        %v960 = vunpack.c.0.s8 %v959
        %v961 = vlaneseq
        %v962 = vshrl.u32 %v961, 7
        %v963 = vsub.s32 %v960, %v962
        %v964 = vrot.slane %v950, %v963
        %v965 = vcombine.low %v909, %v925
        %v966 = vcombine.high %v909, %v925
        %v968 = vunpack.c.l.s4 1934713408
        %v969 = vunpack.c.0.s8 %v968
        %v970 = vlaneseq
        %v971 = vshrl.u32 %v970, 7
        %v972 = vsub.s32 %v969, %v971
        %v973 = vrot.slane %v965, %v972
        %v975 = vunpack.c.l.s4 1934713408
        %v976 = vunpack.c.0.s8 %v975
        %v977 = vlaneseq
        %v978 = vshrl.u32 %v977, 7
        %v979 = vsub.s32 %v976, %v978
        %v980 = vrot.slane %v966, %v979
        %v981 = vcombine.low %v916, %v932
        %v982 = vcombine.high %v916, %v932
        %v984 = vunpack.c.l.s4 1934713408
        %v985 = vunpack.c.0.s8 %v984
        %v986 = vlaneseq
        %v987 = vshrl.u32 %v986, 7
        %v988 = vsub.s32 %v985, %v987
        %v989 = vrot.slane %v981, %v988
        %v991 = vunpack.c.l.s4 1934713408
        %v992 = vunpack.c.0.s8 %v991
        %v993 = vlaneseq
        %v994 = vshrl.u32 %v993, 7
        %v995 = vsub.s32 %v992, %v994
        %v996 = vrot.slane %v982, %v995
        %v997 = vcombine.low %v941, %v973
        %v998 = vcombine.high %v941, %v973
        %v999 = vcombine.low %v948, %v980
        %v1000 = vcombine.high %v948, %v980
        %v1001 = vcombine.low %v957, %v989
        %v1002 = vcombine.high %v957, %v989
        %v1003 = vcombine.low %v964, %v996
        %v1004 = vcombine.high %v964, %v996
        %v1005 = vcombine.low %v438, %v446
        %v1006 = vcombine.high %v438, %v446
        %v1008 = vunpack.c.l.s4 1983009808
        %v1009 = vunpack.c.0.s8 %v1008
        %v1010 = vlaneseq
        %v1011 = vshrl.u32 %v1010, 7
        %v1012 = vsub.s32 %v1009, %v1011
        %v1013 = vrot.slane %v1005, %v1012
        %v1015 = vunpack.c.l.s4 1983009808
        %v1016 = vunpack.c.0.s8 %v1015
        %v1017 = vlaneseq
        %v1018 = vshrl.u32 %v1017, 7
        %v1019 = vsub.s32 %v1016, %v1018
        %v1020 = vrot.slane %v1006, %v1019
        %v1021 = vcombine.low %v442, %v450
        %v1022 = vcombine.high %v442, %v450
        %v1024 = vunpack.c.l.s4 1983009808
        %v1025 = vunpack.c.0.s8 %v1024
        %v1026 = vlaneseq
        %v1027 = vshrl.u32 %v1026, 7
        %v1028 = vsub.s32 %v1025, %v1027
        %v1029 = vrot.slane %v1021, %v1028
        %v1031 = vunpack.c.l.s4 1983009808
        %v1032 = vunpack.c.0.s8 %v1031
        %v1033 = vlaneseq
        %v1034 = vshrl.u32 %v1033, 7
        %v1035 = vsub.s32 %v1032, %v1034
        %v1036 = vrot.slane %v1022, %v1035
        %v1037 = vcombine.low %v1013, %v1029
        %v1038 = vcombine.high %v1013, %v1029
        %v1040 = vunpack.c.l.s4 1934713408
        %v1041 = vunpack.c.0.s8 %v1040
        %v1042 = vlaneseq
        %v1043 = vshrl.u32 %v1042, 7
        %v1044 = vsub.s32 %v1041, %v1043
        %v1045 = vrot.slane %v1037, %v1044
        %v1047 = vunpack.c.l.s4 1934713408
        %v1048 = vunpack.c.0.s8 %v1047
        %v1049 = vlaneseq
        %v1050 = vshrl.u32 %v1049, 7
        %v1051 = vsub.s32 %v1048, %v1050
        %v1052 = vrot.slane %v1038, %v1051
        %v1053 = vcombine.low %v1020, %v1036
        %v1054 = vcombine.high %v1020, %v1036
        %v1056 = vunpack.c.l.s4 1934713408
        %v1057 = vunpack.c.0.s8 %v1056
        %v1058 = vlaneseq
        %v1059 = vshrl.u32 %v1058, 7
        %v1060 = vsub.s32 %v1057, %v1059
        %v1061 = vrot.slane %v1053, %v1060
        %v1063 = vunpack.c.l.s4 1934713408
        %v1064 = vunpack.c.0.s8 %v1063
        %v1065 = vlaneseq
        %v1066 = vshrl.u32 %v1065, 7
        %v1067 = vsub.s32 %v1064, %v1066
        %v1068 = vrot.slane %v1054, %v1067
        %v1069 = vcombine.high %v1045, 0.0
        %v1070 = vcombine.high %v1052, 0.0
        %v1071 = vcombine.high %v1061, 0.0
        %v1072 = vcombine.high %v1068, 0.0
        %v1073 = vcombine.low %v260, %v264
        %v1074 = vcombine.high %v260, %v264
        %v1076 = vunpack.c.l.s4 1983009808
        %v1077 = vunpack.c.0.s8 %v1076
        %v1078 = vlaneseq
        %v1079 = vshrl.u32 %v1078, 7
        %v1080 = vsub.s32 %v1077, %v1079
        %v1081 = vrot.slane %v1073, %v1080
        %v1083 = vunpack.c.l.s4 1983009808
        %v1084 = vunpack.c.0.s8 %v1083
        %v1085 = vlaneseq
        %v1086 = vshrl.u32 %v1085, 7
        %v1087 = vsub.s32 %v1084, %v1086
        %v1088 = vrot.slane %v1074, %v1087
        %v1089 = vcombine.low %v262, %v266
        %v1090 = vcombine.high %v262, %v266
        %v1092 = vunpack.c.l.s4 1983009808
        %v1093 = vunpack.c.0.s8 %v1092
        %v1094 = vlaneseq
        %v1095 = vshrl.u32 %v1094, 7
        %v1096 = vsub.s32 %v1093, %v1095
        %v1097 = vrot.slane %v1089, %v1096
        %v1099 = vunpack.c.l.s4 1983009808
        %v1100 = vunpack.c.0.s8 %v1099
        %v1101 = vlaneseq
        %v1102 = vshrl.u32 %v1101, 7
        %v1103 = vsub.s32 %v1100, %v1102
        %v1104 = vrot.slane %v1090, %v1103
        %v1105 = vcombine.low %v278, %v286
        %v1106 = vcombine.high %v278, %v286
        %v1108 = vunpack.c.l.s4 1983009808
        %v1109 = vunpack.c.0.s8 %v1108
        %v1110 = vlaneseq
        %v1111 = vshrl.u32 %v1110, 7
        %v1112 = vsub.s32 %v1109, %v1111
        %v1113 = vrot.slane %v1105, %v1112
        %v1115 = vunpack.c.l.s4 1983009808
        %v1116 = vunpack.c.0.s8 %v1115
        %v1117 = vlaneseq
        %v1118 = vshrl.u32 %v1117, 7
        %v1119 = vsub.s32 %v1116, %v1118
        %v1120 = vrot.slane %v1106, %v1119
        %v1121 = vcombine.low %v282, %v290
        %v1122 = vcombine.high %v282, %v290
        %v1124 = vunpack.c.l.s4 1983009808
        %v1125 = vunpack.c.0.s8 %v1124
        %v1126 = vlaneseq
        %v1127 = vshrl.u32 %v1126, 7
        %v1128 = vsub.s32 %v1125, %v1127
        %v1129 = vrot.slane %v1121, %v1128
        %v1131 = vunpack.c.l.s4 1983009808
        %v1132 = vunpack.c.0.s8 %v1131
        %v1133 = vlaneseq
        %v1134 = vshrl.u32 %v1133, 7
        %v1135 = vsub.s32 %v1132, %v1134
        %v1136 = vrot.slane %v1122, %v1135
        %v1137 = vcombine.low %v1081, %v1097
        %v1138 = vcombine.high %v1081, %v1097
        %v1140 = vunpack.c.l.s4 1934713408
        %v1141 = vunpack.c.0.s8 %v1140
        %v1142 = vlaneseq
        %v1143 = vshrl.u32 %v1142, 7
        %v1144 = vsub.s32 %v1141, %v1143
        %v1145 = vrot.slane %v1137, %v1144
        %v1147 = vunpack.c.l.s4 1934713408
        %v1148 = vunpack.c.0.s8 %v1147
        %v1149 = vlaneseq
        %v1150 = vshrl.u32 %v1149, 7
        %v1151 = vsub.s32 %v1148, %v1150
        %v1152 = vrot.slane %v1138, %v1151
        %v1153 = vcombine.low %v1088, %v1104
        %v1155 = vunpack.c.l.s4 1934713408
        %v1156 = vunpack.c.0.s8 %v1155
        %v1157 = vlaneseq
        %v1158 = vshrl.u32 %v1157, 7
        %v1159 = vsub.s32 %v1156, %v1158
        %v1160 = vrot.slane %v1153, %v1159
        %v1161 = vcombine.low %v1113, %v1129
        %v1162 = vcombine.high %v1113, %v1129
        %v1164 = vunpack.c.l.s4 1934713408
        %v1165 = vunpack.c.0.s8 %v1164
        %v1166 = vlaneseq
        %v1167 = vshrl.u32 %v1166, 7
        %v1168 = vsub.s32 %v1165, %v1167
        %v1169 = vrot.slane %v1161, %v1168
        %v1171 = vunpack.c.l.s4 1934713408
        %v1172 = vunpack.c.0.s8 %v1171
        %v1173 = vlaneseq
        %v1174 = vshrl.u32 %v1173, 7
        %v1175 = vsub.s32 %v1172, %v1174
        %v1176 = vrot.slane %v1162, %v1175
        %v1177 = vcombine.low %v1120, %v1136
        %v1179 = vunpack.c.l.s4 1934713408
        %v1180 = vunpack.c.0.s8 %v1179
        %v1181 = vlaneseq
        %v1182 = vshrl.u32 %v1181, 7
        %v1183 = vsub.s32 %v1180, %v1182
        %v1184 = vrot.slane %v1177, %v1183
        %v1185 = vcombine.low %v1145, %v1169
        %v1186 = vcombine.high %v1145, %v1169
        %v1187 = vcombine.low %v1152, %v1176
        %v1188 = vcombine.high %v1152, %v1176
        %v1189 = vcombine.low %v1160, %v1184
        %v1190 = vcombine.high %v1160, %v1184
        %v1191 = vcombine.low %v302, %v310
        %v1192 = vcombine.high %v302, %v310
        %v1194 = vunpack.c.l.s4 1983009808
        %v1195 = vunpack.c.0.s8 %v1194
        %v1196 = vlaneseq
        %v1197 = vshrl.u32 %v1196, 7
        %v1198 = vsub.s32 %v1195, %v1197
        %v1199 = vrot.slane %v1191, %v1198
        %v1201 = vunpack.c.l.s4 1983009808
        %v1202 = vunpack.c.0.s8 %v1201
        %v1203 = vlaneseq
        %v1204 = vshrl.u32 %v1203, 7
        %v1205 = vsub.s32 %v1202, %v1204
        %v1206 = vrot.slane %v1192, %v1205
        %v1207 = vcombine.low %v306, %v314
        %v1208 = vcombine.high %v306, %v314
        %v1210 = vunpack.c.l.s4 1983009808
        %v1211 = vunpack.c.0.s8 %v1210
        %v1212 = vlaneseq
        %v1213 = vshrl.u32 %v1212, 7
        %v1214 = vsub.s32 %v1211, %v1213
        %v1215 = vrot.slane %v1207, %v1214
        %v1217 = vunpack.c.l.s4 1983009808
        %v1218 = vunpack.c.0.s8 %v1217
        %v1219 = vlaneseq
        %v1220 = vshrl.u32 %v1219, 7
        %v1221 = vsub.s32 %v1218, %v1220
        %v1222 = vrot.slane %v1208, %v1221
        %v1223 = vcombine.low %v325, %v331
        %v1224 = vcombine.high %v325, %v331
        %v1226 = vunpack.c.l.s4 1983009808
        %v1227 = vunpack.c.0.s8 %v1226
        %v1228 = vlaneseq
        %v1229 = vshrl.u32 %v1228, 7
        %v1230 = vsub.s32 %v1227, %v1229
        %v1231 = vrot.slane %v1223, %v1230
        %v1233 = vunpack.c.l.s4 1983009808
        %v1234 = vunpack.c.0.s8 %v1233
        %v1235 = vlaneseq
        %v1236 = vshrl.u32 %v1235, 7
        %v1237 = vsub.s32 %v1234, %v1236
        %v1238 = vrot.slane %v1224, %v1237
        %v1239 = vcombine.low %v328, %v334
        %v1240 = vcombine.high %v328, %v334
        %v1242 = vunpack.c.l.s4 1983009808
        %v1243 = vunpack.c.0.s8 %v1242
        %v1244 = vlaneseq
        %v1245 = vshrl.u32 %v1244, 7
        %v1246 = vsub.s32 %v1243, %v1245
        %v1247 = vrot.slane %v1239, %v1246
        %v1249 = vunpack.c.l.s4 1983009808
        %v1250 = vunpack.c.0.s8 %v1249
        %v1251 = vlaneseq
        %v1252 = vshrl.u32 %v1251, 7
        %v1253 = vsub.s32 %v1250, %v1252
        %v1254 = vrot.slane %v1240, %v1253
        %v1255 = vcombine.low %v1199, %v1215
        %v1256 = vcombine.high %v1199, %v1215
        %v1258 = vunpack.c.l.s4 1934713408
        %v1259 = vunpack.c.0.s8 %v1258
        %v1260 = vlaneseq
        %v1261 = vshrl.u32 %v1260, 7
        %v1262 = vsub.s32 %v1259, %v1261
        %v1263 = vrot.slane %v1255, %v1262
        %v1265 = vunpack.c.l.s4 1934713408
        %v1266 = vunpack.c.0.s8 %v1265
        %v1267 = vlaneseq
        %v1268 = vshrl.u32 %v1267, 7
        %v1269 = vsub.s32 %v1266, %v1268
        %v1270 = vrot.slane %v1256, %v1269
        %v1271 = vcombine.low %v1206, %v1222
        %v1273 = vunpack.c.l.s4 1934713408
        %v1274 = vunpack.c.0.s8 %v1273
        %v1275 = vlaneseq
        %v1276 = vshrl.u32 %v1275, 7
        %v1277 = vsub.s32 %v1274, %v1276
        %v1278 = vrot.slane %v1271, %v1277
        %v1279 = vcombine.low %v1231, %v1247
        %v1280 = vcombine.high %v1231, %v1247
        %v1282 = vunpack.c.l.s4 1934713408
        %v1283 = vunpack.c.0.s8 %v1282
        %v1284 = vlaneseq
        %v1285 = vshrl.u32 %v1284, 7
        %v1286 = vsub.s32 %v1283, %v1285
        %v1287 = vrot.slane %v1279, %v1286
        %v1289 = vunpack.c.l.s4 1934713408
        %v1290 = vunpack.c.0.s8 %v1289
        %v1291 = vlaneseq
        %v1292 = vshrl.u32 %v1291, 7
        %v1293 = vsub.s32 %v1290, %v1292
        %v1294 = vrot.slane %v1280, %v1293
        %v1295 = vcombine.low %v1238, %v1254
        %v1297 = vunpack.c.l.s4 1934713408
        %v1298 = vunpack.c.0.s8 %v1297
        %v1299 = vlaneseq
        %v1300 = vshrl.u32 %v1299, 7
        %v1301 = vsub.s32 %v1298, %v1300
        %v1302 = vrot.slane %v1295, %v1301
        %v1303 = vcombine.low %v1263, %v1287
        %v1304 = vcombine.high %v1263, %v1287
        %v1305 = vcombine.low %v1270, %v1294
        %v1306 = vcombine.high %v1270, %v1294
        %v1307 = vcombine.low %v1278, %v1302
        %v1308 = vcombine.high %v1278, %v1302
        %v1309 = vcombine.low %v347, %v355
        %v1310 = vcombine.high %v347, %v355
        %v1312 = vunpack.c.l.s4 1983009808
        %v1313 = vunpack.c.0.s8 %v1312
        %v1314 = vlaneseq
        %v1315 = vshrl.u32 %v1314, 7
        %v1316 = vsub.s32 %v1313, %v1315
        %v1317 = vrot.slane %v1309, %v1316
        %v1319 = vunpack.c.l.s4 1983009808
        %v1320 = vunpack.c.0.s8 %v1319
        %v1321 = vlaneseq
        %v1322 = vshrl.u32 %v1321, 7
        %v1323 = vsub.s32 %v1320, %v1322
        %v1324 = vrot.slane %v1310, %v1323
        %v1325 = vcombine.low %v351, %v359
        %v1326 = vcombine.high %v351, %v359
        %v1328 = vunpack.c.l.s4 1983009808
        %v1329 = vunpack.c.0.s8 %v1328
        %v1330 = vlaneseq
        %v1331 = vshrl.u32 %v1330, 7
        %v1332 = vsub.s32 %v1329, %v1331
        %v1333 = vrot.slane %v1325, %v1332
        %v1335 = vunpack.c.l.s4 1983009808
        %v1336 = vunpack.c.0.s8 %v1335
        %v1337 = vlaneseq
        %v1338 = vshrl.u32 %v1337, 7
        %v1339 = vsub.s32 %v1336, %v1338
        %v1340 = vrot.slane %v1326, %v1339
        %v1341 = vcombine.low %v371, %v379
        %v1342 = vcombine.high %v371, %v379
        %v1344 = vunpack.c.l.s4 1983009808
        %v1345 = vunpack.c.0.s8 %v1344
        %v1346 = vlaneseq
        %v1347 = vshrl.u32 %v1346, 7
        %v1348 = vsub.s32 %v1345, %v1347
        %v1349 = vrot.slane %v1341, %v1348
        %v1351 = vunpack.c.l.s4 1983009808
        %v1352 = vunpack.c.0.s8 %v1351
        %v1353 = vlaneseq
        %v1354 = vshrl.u32 %v1353, 7
        %v1355 = vsub.s32 %v1352, %v1354
        %v1356 = vrot.slane %v1342, %v1355
        %v1357 = vcombine.low %v375, %v383
        %v1358 = vcombine.high %v375, %v383
        %v1360 = vunpack.c.l.s4 1983009808
        %v1361 = vunpack.c.0.s8 %v1360
        %v1362 = vlaneseq
        %v1363 = vshrl.u32 %v1362, 7
        %v1364 = vsub.s32 %v1361, %v1363
        %v1365 = vrot.slane %v1357, %v1364
        %v1367 = vunpack.c.l.s4 1983009808
        %v1368 = vunpack.c.0.s8 %v1367
        %v1369 = vlaneseq
        %v1370 = vshrl.u32 %v1369, 7
        %v1371 = vsub.s32 %v1368, %v1370
        %v1372 = vrot.slane %v1358, %v1371
        %v1373 = vcombine.low %v1317, %v1333
        %v1374 = vcombine.high %v1317, %v1333
        %v1376 = vunpack.c.l.s4 1934713408
        %v1377 = vunpack.c.0.s8 %v1376
        %v1378 = vlaneseq
        %v1379 = vshrl.u32 %v1378, 7
        %v1380 = vsub.s32 %v1377, %v1379
        %v1381 = vrot.slane %v1373, %v1380
        %v1383 = vunpack.c.l.s4 1934713408
        %v1384 = vunpack.c.0.s8 %v1383
        %v1385 = vlaneseq
        %v1386 = vshrl.u32 %v1385, 7
        %v1387 = vsub.s32 %v1384, %v1386
        %v1388 = vrot.slane %v1374, %v1387
        %v1389 = vcombine.low %v1324, %v1340
        %v1391 = vunpack.c.l.s4 1934713408
        %v1392 = vunpack.c.0.s8 %v1391
        %v1393 = vlaneseq
        %v1394 = vshrl.u32 %v1393, 7
        %v1395 = vsub.s32 %v1392, %v1394
        %v1396 = vrot.slane %v1389, %v1395
        %v1397 = vcombine.low %v1349, %v1365
        %v1398 = vcombine.high %v1349, %v1365
        %v1400 = vunpack.c.l.s4 1934713408
        %v1401 = vunpack.c.0.s8 %v1400
        %v1402 = vlaneseq
        %v1403 = vshrl.u32 %v1402, 7
        %v1404 = vsub.s32 %v1401, %v1403
        %v1405 = vrot.slane %v1397, %v1404
        %v1407 = vunpack.c.l.s4 1934713408
        %v1408 = vunpack.c.0.s8 %v1407
        %v1409 = vlaneseq
        %v1410 = vshrl.u32 %v1409, 7
        %v1411 = vsub.s32 %v1408, %v1410
        %v1412 = vrot.slane %v1398, %v1411
        %v1413 = vcombine.low %v1356, %v1372
        %v1415 = vunpack.c.l.s4 1934713408
        %v1416 = vunpack.c.0.s8 %v1415
        %v1417 = vlaneseq
        %v1418 = vshrl.u32 %v1417, 7
        %v1419 = vsub.s32 %v1416, %v1418
        %v1420 = vrot.slane %v1413, %v1419
        %v1421 = vcombine.low %v1381, %v1405
        %v1422 = vcombine.high %v1381, %v1405
        %v1423 = vcombine.low %v1388, %v1412
        %v1424 = vcombine.high %v1388, %v1412
        %v1425 = vcombine.low %v1396, %v1420
        %v1426 = vcombine.high %v1396, %v1420
        %v1427 = vcombine.low %v394, %v400
        %v1428 = vcombine.high %v394, %v400
        %v1430 = vunpack.c.l.s4 1983009808
        %v1431 = vunpack.c.0.s8 %v1430
        %v1432 = vlaneseq
        %v1433 = vshrl.u32 %v1432, 7
        %v1434 = vsub.s32 %v1431, %v1433
        %v1435 = vrot.slane %v1427, %v1434
        %v1437 = vunpack.c.l.s4 1983009808
        %v1438 = vunpack.c.0.s8 %v1437
        %v1439 = vlaneseq
        %v1440 = vshrl.u32 %v1439, 7
        %v1441 = vsub.s32 %v1438, %v1440
        %v1442 = vrot.slane %v1428, %v1441
        %v1443 = vcombine.low %v397, %v403
        %v1444 = vcombine.high %v397, %v403
        %v1446 = vunpack.c.l.s4 1983009808
        %v1447 = vunpack.c.0.s8 %v1446
        %v1448 = vlaneseq
        %v1449 = vshrl.u32 %v1448, 7
        %v1450 = vsub.s32 %v1447, %v1449
        %v1451 = vrot.slane %v1443, %v1450
        %v1453 = vunpack.c.l.s4 1983009808
        %v1454 = vunpack.c.0.s8 %v1453
        %v1455 = vlaneseq
        %v1456 = vshrl.u32 %v1455, 7
        %v1457 = vsub.s32 %v1454, %v1456
        %v1458 = vrot.slane %v1444, %v1457
        %v1459 = vcombine.low %v416, %v424
        %v1460 = vcombine.high %v416, %v424
        %v1462 = vunpack.c.l.s4 1983009808
        %v1463 = vunpack.c.0.s8 %v1462
        %v1464 = vlaneseq
        %v1465 = vshrl.u32 %v1464, 7
        %v1466 = vsub.s32 %v1463, %v1465
        %v1467 = vrot.slane %v1459, %v1466
        %v1469 = vunpack.c.l.s4 1983009808
        %v1470 = vunpack.c.0.s8 %v1469
        %v1471 = vlaneseq
        %v1472 = vshrl.u32 %v1471, 7
        %v1473 = vsub.s32 %v1470, %v1472
        %v1474 = vrot.slane %v1460, %v1473
        %v1475 = vcombine.low %v420, %v428
        %v1476 = vcombine.high %v420, %v428
        %v1478 = vunpack.c.l.s4 1983009808
        %v1479 = vunpack.c.0.s8 %v1478
        %v1480 = vlaneseq
        %v1481 = vshrl.u32 %v1480, 7
        %v1482 = vsub.s32 %v1479, %v1481
        %v1483 = vrot.slane %v1475, %v1482
        %v1485 = vunpack.c.l.s4 1983009808
        %v1486 = vunpack.c.0.s8 %v1485
        %v1487 = vlaneseq
        %v1488 = vshrl.u32 %v1487, 7
        %v1489 = vsub.s32 %v1486, %v1488
        %v1490 = vrot.slane %v1476, %v1489
        %v1491 = vcombine.low %v1435, %v1451
        %v1492 = vcombine.high %v1435, %v1451
        %v1494 = vunpack.c.l.s4 1934713408
        %v1495 = vunpack.c.0.s8 %v1494
        %v1496 = vlaneseq
        %v1497 = vshrl.u32 %v1496, 7
        %v1498 = vsub.s32 %v1495, %v1497
        %v1499 = vrot.slane %v1491, %v1498
        %v1501 = vunpack.c.l.s4 1934713408
        %v1502 = vunpack.c.0.s8 %v1501
        %v1503 = vlaneseq
        %v1504 = vshrl.u32 %v1503, 7
        %v1505 = vsub.s32 %v1502, %v1504
        %v1506 = vrot.slane %v1492, %v1505
        %v1507 = vcombine.low %v1442, %v1458
        %v1509 = vunpack.c.l.s4 1934713408
        %v1510 = vunpack.c.0.s8 %v1509
        %v1511 = vlaneseq
        %v1512 = vshrl.u32 %v1511, 7
        %v1513 = vsub.s32 %v1510, %v1512
        %v1514 = vrot.slane %v1507, %v1513
        %v1515 = vcombine.low %v1467, %v1483
        %v1516 = vcombine.high %v1467, %v1483
        %v1518 = vunpack.c.l.s4 1934713408
        %v1519 = vunpack.c.0.s8 %v1518
        %v1520 = vlaneseq
        %v1521 = vshrl.u32 %v1520, 7
        %v1522 = vsub.s32 %v1519, %v1521
        %v1523 = vrot.slane %v1515, %v1522
        %v1525 = vunpack.c.l.s4 1934713408
        %v1526 = vunpack.c.0.s8 %v1525
        %v1527 = vlaneseq
        %v1528 = vshrl.u32 %v1527, 7
        %v1529 = vsub.s32 %v1526, %v1528
        %v1530 = vrot.slane %v1516, %v1529
        %v1531 = vcombine.low %v1474, %v1490
        %v1533 = vunpack.c.l.s4 1934713408
        %v1534 = vunpack.c.0.s8 %v1533
        %v1535 = vlaneseq
        %v1536 = vshrl.u32 %v1535, 7
        %v1537 = vsub.s32 %v1534, %v1536
        %v1538 = vrot.slane %v1531, %v1537
        %v1539 = vcombine.low %v1499, %v1523
        %v1540 = vcombine.high %v1499, %v1523
        %v1541 = vcombine.low %v1506, %v1530
        %v1542 = vcombine.high %v1506, %v1530
        %v1543 = vcombine.low %v1514, %v1538
        %v1544 = vcombine.high %v1514, %v1538
        %v1545 = vcombine.low %v440, %v448
        %v1546 = vcombine.high %v440, %v448
        %v1548 = vunpack.c.l.s4 1983009808
        %v1549 = vunpack.c.0.s8 %v1548
        %v1550 = vlaneseq
        %v1551 = vshrl.u32 %v1550, 7
        %v1552 = vsub.s32 %v1549, %v1551
        %v1553 = vrot.slane %v1545, %v1552
        %v1555 = vunpack.c.l.s4 1983009808
        %v1556 = vunpack.c.0.s8 %v1555
        %v1557 = vlaneseq
        %v1558 = vshrl.u32 %v1557, 7
        %v1559 = vsub.s32 %v1556, %v1558
        %v1560 = vrot.slane %v1546, %v1559
        %v1561 = vcombine.low %v444, %v452
        %v1562 = vcombine.high %v444, %v452
        %v1564 = vunpack.c.l.s4 1983009808
        %v1565 = vunpack.c.0.s8 %v1564
        %v1566 = vlaneseq
        %v1567 = vshrl.u32 %v1566, 7
        %v1568 = vsub.s32 %v1565, %v1567
        %v1569 = vrot.slane %v1561, %v1568
        %v1571 = vunpack.c.l.s4 1983009808
        %v1572 = vunpack.c.0.s8 %v1571
        %v1573 = vlaneseq
        %v1574 = vshrl.u32 %v1573, 7
        %v1575 = vsub.s32 %v1572, %v1574
        %v1576 = vrot.slane %v1562, %v1575
        %v1577 = vcombine.low %v1553, %v1569
        %v1578 = vcombine.high %v1553, %v1569
        %v1580 = vunpack.c.l.s4 1934713408
        %v1581 = vunpack.c.0.s8 %v1580
        %v1582 = vlaneseq
        %v1583 = vshrl.u32 %v1582, 7
        %v1584 = vsub.s32 %v1581, %v1583
        %v1585 = vrot.slane %v1577, %v1584
        %v1587 = vunpack.c.l.s4 1934713408
        %v1588 = vunpack.c.0.s8 %v1587
        %v1589 = vlaneseq
        %v1590 = vshrl.u32 %v1589, 7
        %v1591 = vsub.s32 %v1588, %v1590
        %v1592 = vrot.slane %v1578, %v1591
        %v1593 = vcombine.low %v1560, %v1576
        %v1595 = vunpack.c.l.s4 1934713408
        %v1596 = vunpack.c.0.s8 %v1595
        %v1597 = vlaneseq
        %v1598 = vshrl.u32 %v1597, 7
        %v1599 = vsub.s32 %v1596, %v1598
        %v1600 = vrot.slane %v1593, %v1599
        %v1601 = vcombine.high %v1585, 0.0
        %v1602 = vcombine.high %v1592, 0.0
        %v1603 = vcombine.high %v1600, 0.0
        %1609 = vrot.lane.b32.xlu0 %v590, 14
        %v1610 = vpop.permute.xlu0 %1609
        %1611 = vrot.lane.b32.xlu0 %v726, 14
        %v1612 = vpop.permute.xlu0 %1611
        %1613 = vrot.lane.b32.xlu0 %v862, 14
        %v1614 = vpop.permute.xlu0 %1613
        %1615 = vrot.lane.b32.xlu0 %v998, 14
        %v1616 = vpop.permute.xlu0 %1615
        %1617 = vrot.lane.b32.xlu0 %v1069, 14
        %v1618 = vpop.permute.xlu0 %1617
        %1629 = vrot.lane.b32.xlu0 %v591, 28
        %v1630 = vpop.permute.xlu0 %1629
        %1631 = vrot.lane.b32.xlu0 %v727, 28
        %v1632 = vpop.permute.xlu0 %1631
        %1633 = vrot.lane.b32.xlu0 %v863, 28
        %v1634 = vpop.permute.xlu0 %1633
        %1635 = vrot.lane.b32.xlu0 %v999, 28
        %v1636 = vpop.permute.xlu0 %1635
        %1637 = vrot.lane.b32.xlu0 %v1052, 28
        %v1638 = vpop.permute.xlu0 %1637
        %1649 = vrot.lane.b32.xlu0 %v592, 42
        %v1650 = vpop.permute.xlu0 %1649
        %1651 = vrot.lane.b32.xlu0 %v728, 42
        %v1652 = vpop.permute.xlu0 %1651
        %1653 = vrot.lane.b32.xlu0 %v864, 42
        %v1654 = vpop.permute.xlu0 %1653
        %1655 = vrot.lane.b32.xlu0 %v1000, 42
        %v1656 = vpop.permute.xlu0 %1655
        %1657 = vrot.lane.b32.xlu0 %v1070, 42
        %v1658 = vpop.permute.xlu0 %1657
        %1669 = vrot.lane.b32.xlu0 %v593, 56
        %v1670 = vpop.permute.xlu0 %1669
        %1671 = vrot.lane.b32.xlu0 %v729, 56
        %v1672 = vpop.permute.xlu0 %1671
        %1673 = vrot.lane.b32.xlu0 %v865, 56
        %v1674 = vpop.permute.xlu0 %1673
        %1675 = vrot.lane.b32.xlu0 %v1001, 56
        %v1676 = vpop.permute.xlu0 %1675
        %1677 = vrot.lane.b32.xlu0 %v1061, 56
        %v1678 = vpop.permute.xlu0 %1677
        %1689 = vrot.lane.b32.xlu0 %v594, 70
        %v1690 = vpop.permute.xlu0 %1689
        %1691 = vrot.lane.b32.xlu0 %v730, 70
        %v1692 = vpop.permute.xlu0 %1691
        %1693 = vrot.lane.b32.xlu0 %v866, 70
        %v1694 = vpop.permute.xlu0 %1693
        %1695 = vrot.lane.b32.xlu0 %v1002, 70
        %v1696 = vpop.permute.xlu0 %1695
        %1697 = vrot.lane.b32.xlu0 %v1071, 70
        %v1698 = vpop.permute.xlu0 %1697
        %1709 = vrot.lane.b32.xlu0 %v595, 84
        %v1710 = vpop.permute.xlu0 %1709
        %1711 = vrot.lane.b32.xlu0 %v731, 84
        %v1712 = vpop.permute.xlu0 %1711
        %1713 = vrot.lane.b32.xlu0 %v867, 84
        %v1714 = vpop.permute.xlu0 %1713
        %1715 = vrot.lane.b32.xlu0 %v1003, 84
        %v1716 = vpop.permute.xlu0 %1715
        %1717 = vrot.lane.b32.xlu0 %v1068, 84
        %v1718 = vpop.permute.xlu0 %1717
        %1729 = vrot.lane.b32.xlu0 %v596, 98
        %v1730 = vpop.permute.xlu0 %1729
        %1731 = vrot.lane.b32.xlu0 %v732, 98
        %v1732 = vpop.permute.xlu0 %1731
        %1733 = vrot.lane.b32.xlu0 %v868, 98
        %v1734 = vpop.permute.xlu0 %1733
        %1735 = vrot.lane.b32.xlu0 %v1004, 98
        %v1736 = vpop.permute.xlu0 %1735
        %1737 = vrot.lane.b32.xlu0 %v1072, 98
        %v1738 = vpop.permute.xlu0 %1737
        %1749 = vrot.lane.b32.xlu0 %v1185, 112
        %v1750 = vpop.permute.xlu0 %1749
        %1751 = vrot.lane.b32.xlu0 %v1303, 112
        %v1752 = vpop.permute.xlu0 %1751
        %1753 = vrot.lane.b32.xlu0 %v1421, 112
        %v1754 = vpop.permute.xlu0 %1753
        %1755 = vrot.lane.b32.xlu0 %v1539, 112
        %v1756 = vpop.permute.xlu0 %1755
        %1757 = vrot.lane.b32.xlu0 %v1585, 112
        %v1758 = vpop.permute.xlu0 %1757
        %1769 = vrot.lane.b32.xlu0 %v1186, 126
        %v1770 = vpop.permute.xlu0 %1769
        %1771 = vrot.lane.b32.xlu0 %v1304, 126
        %v1772 = vpop.permute.xlu0 %1771
        %1773 = vrot.lane.b32.xlu0 %v1422, 126
        %v1774 = vpop.permute.xlu0 %1773
        %1775 = vrot.lane.b32.xlu0 %v1540, 126
        %v1776 = vpop.permute.xlu0 %1775
        %1777 = vrot.lane.b32.xlu0 %v1601, 126
        %v1778 = vpop.permute.xlu0 %1777
        %1789 = vrot.lane.b32.xlu0 %v1187, 12
        %v1790 = vpop.permute.xlu0 %1789
        %1791 = vrot.lane.b32.xlu0 %v1305, 12
        %v1792 = vpop.permute.xlu0 %1791
        %1793 = vrot.lane.b32.xlu0 %v1423, 12
        %v1794 = vpop.permute.xlu0 %1793
        %1795 = vrot.lane.b32.xlu0 %v1541, 12
        %v1796 = vpop.permute.xlu0 %1795
        %1797 = vrot.lane.b32.xlu0 %v1592, 12
        %v1798 = vpop.permute.xlu0 %1797
        %1809 = vrot.lane.b32.xlu0 %v1188, 26
        %v1810 = vpop.permute.xlu0 %1809
        %1811 = vrot.lane.b32.xlu0 %v1306, 26
        %v1812 = vpop.permute.xlu0 %1811
        %1813 = vrot.lane.b32.xlu0 %v1424, 26
        %v1814 = vpop.permute.xlu0 %1813
        %1815 = vrot.lane.b32.xlu0 %v1542, 26
        %v1816 = vpop.permute.xlu0 %1815
        %1817 = vrot.lane.b32.xlu0 %v1602, 26
        %v1818 = vpop.permute.xlu0 %1817
        %1829 = vrot.lane.b32.xlu0 %v1189, 40
        %v1830 = vpop.permute.xlu0 %1829
        %1831 = vrot.lane.b32.xlu0 %v1307, 40
        %v1832 = vpop.permute.xlu0 %1831
        %1833 = vrot.lane.b32.xlu0 %v1425, 40
        %v1834 = vpop.permute.xlu0 %1833
        %1835 = vrot.lane.b32.xlu0 %v1543, 40
        %v1836 = vpop.permute.xlu0 %1835
        %1837 = vrot.lane.b32.xlu0 %v1600, 40
        %v1838 = vpop.permute.xlu0 %1837
        %1849 = vrot.lane.b32.xlu0 %v1190, 54
        %v1850 = vpop.permute.xlu0 %1849
        %1851 = vrot.lane.b32.xlu0 %v1308, 54
        %v1852 = vpop.permute.xlu0 %1851
        %1853 = vrot.lane.b32.xlu0 %v1426, 54
        %v1854 = vpop.permute.xlu0 %1853
        %1855 = vrot.lane.b32.xlu0 %v1544, 54
        %v1856 = vpop.permute.xlu0 %1855
        %1857 = vrot.lane.b32.xlu0 %v1603, 54
        %v1858 = vpop.permute.xlu0 %1857
        %vm1864 = vcmask 113664
        %v1865 = vsel %vm1864, %v589, %v1610
        %v1866 = vsel %vm1864, %v725, %v1612
        %v1867 = vsel %vm1864, %v861, %v1614
        %v1868 = vsel %vm1864, %v997, %v1616
        %v1869 = vsel %vm1864, %v1045, %v1618
        %vm1870 = vcmask 228352
        %v1871 = vsel %vm1870, %v1865, %v1630
        %v1872 = vsel %vm1870, %v1866, %v1632
        %v1873 = vsel %vm1870, %v1867, %v1634
        %v1874 = vsel %vm1870, %v1868, %v1636
        %v1875 = vsel %vm1870, %v1869, %v1638
        %vm1876 = vcmask 343040
        %v1877 = vsel %vm1876, %v1871, %v1650
        %v1878 = vsel %vm1876, %v1872, %v1652
        %v1879 = vsel %vm1876, %v1873, %v1654
        %v1880 = vsel %vm1876, %v1874, %v1656
        %v1881 = vsel %vm1876, %v1875, %v1658
        %vm1882 = vcmask 457728
        %v1883 = vsel %vm1882, %v1877, %v1670
        %v1884 = vsel %vm1882, %v1878, %v1672
        %v1885 = vsel %vm1882, %v1879, %v1674
        %v1886 = vsel %vm1882, %v1880, %v1676
        %v1887 = vsel %vm1882, %v1881, %v1678
        %vm1888 = vcmask 572416
        %v1889 = vsel %vm1888, %v1883, %v1690
        %v1890 = vsel %vm1888, %v1884, %v1692
        %v1891 = vsel %vm1888, %v1885, %v1694
        %v1892 = vsel %vm1888, %v1886, %v1696
        %v1893 = vsel %vm1888, %v1887, %v1698
        %vm1894 = vcmask 687104
        %v1895 = vsel %vm1894, %v1889, %v1710
        %v1896 = vsel %vm1894, %v1890, %v1712
        %v1897 = vsel %vm1894, %v1891, %v1714
        %v1898 = vsel %vm1894, %v1892, %v1716
        %v1899 = vsel %vm1894, %v1893, %v1718
        %vm1900 = vcmask 801792
        %v1901 = vsel %vm1900, %v1895, %v1730
        %v1902 = vsel %vm1900, %v1896, %v1732
        %v1903 = vsel %vm1900, %v1897, %v1734
        %v1904 = vsel %vm1900, %v1898, %v1736
        %v1905 = vsel %vm1900, %v1899, %v1738
        %vm1906 = vcmask 916480
        %v1907 = vsel %vm1906, %v1901, %v1750
        %v1908 = vsel %vm1906, %v1902, %v1752
        %v1909 = vsel %vm1906, %v1903, %v1754
        %v1910 = vsel %vm1906, %v1904, %v1756
        %v1911 = vsel %vm1906, %v1905, %v1758
        %vm1912 = vcmask 1031168
        %v1913 = vsel %vm1912, %v1907, %v1770
        %v1914 = vsel %vm1912, %v1908, %v1772
        %v1915 = vsel %vm1912, %v1909, %v1774
        %v1916 = vsel %vm1912, %v1910, %v1776
        %v1917 = vsel %vm1912, %v1911, %v1778
        %vm1918 = vcmask 97280
        %v1919 = vsel %vm1918, %v1770, %v1790
        %v1920 = vsel %vm1918, %v1772, %v1792
        %v1921 = vsel %vm1918, %v1774, %v1794
        %v1922 = vsel %vm1918, %v1776, %v1796
        %v1923 = vsel %vm1918, %v1778, %v1798
        %vm1924 = vcmask 211968
        %v1925 = vsel %vm1924, %v1919, %v1810
        %v1926 = vsel %vm1924, %v1920, %v1812
        %v1927 = vsel %vm1924, %v1921, %v1814
        %v1928 = vsel %vm1924, %v1922, %v1816
        %v1929 = vsel %vm1924, %v1923, %v1818
        %vm1930 = vcmask 326656
        %v1931 = vsel %vm1930, %v1925, %v1830
        %v1932 = vsel %vm1930, %v1926, %v1832
        %v1933 = vsel %vm1930, %v1927, %v1834
        %v1934 = vsel %vm1930, %v1928, %v1836
        %v1935 = vsel %vm1930, %v1929, %v1838
        %vm1936 = vcmask 441344
        %v1937 = vsel %vm1936, %v1931, %v1850
        %v1938 = vsel %vm1936, %v1932, %v1852
        %v1939 = vsel %vm1936, %v1933, %v1854
        %v1940 = vsel %vm1936, %v1934, %v1856
        %v1941 = vsel %vm1936, %v1935, %v1858
        %v1942 = vld [vmem:[%s1] sm:$0xff]
        %v1943 = vld [vmem:[%s2] sm:$0xff]
        %1945 = vset.pattern.permute.xlu0 0
        %1946 = vperm.xlu0 %1945, %v1943
        %v1947 = vpop.permute.xlu0 %1946
        %vm1949 = vcmask 293888
        %v1951 = vsel %vm1949, %v1942, 0
        %vm1953 = vcmask 1043456
        %v1955 = vsel %vm1953, %v1917, 0
        %v1958 = vsel %vm1953, %v1941, 0
        %1960 = vmatprep.subr.mxu0 0.0
        %1961 = vmatpush1.msra.mxu0 0.0
        %1962 = vmatprep.subr.mxu0 0.0
        %1963 = vmatpush1.msra.mxu0 0.0
        %1964 = vmatprep.subr.mxu0 0.0
        %1965 = vmatpush1.msra.mxu0 0.0
        %1966 = vmatprep.subr.mxu0 0.0
        %1967 = vmatpush1.msra.mxu0 0.0
        %1968 = vmatprep.subr.mxu0 0.0
        %1969 = vmatpush1.msra.mxu0 0.0
        %1970 = vmatprep.subr.mxu0 0.0
        %1971 = vmatpush1.msra.mxu0 0.0
        %1972 = vmatprep.subr.mxu0 0.0
        %1973 = vmatpush1.msra.mxu0 0.0
        %1974 = vmatprep.subr.mxu0 0.0
        %1975 = vmatpush1.msra.mxu0 0.0
        %1976 = vmatprep.subr.mxu0 0.0
        %1977 = vmatpush1.msra.mxu0 0.0
        %1978 = vmatprep.subr.mxu0 0.0
        %1979 = vmatpush1.msra.mxu0 0.0
        %1980 = vmatprep.subr.mxu0 0.0
        %1981 = vmatpush1.msra.mxu0 0.0
        %1982 = vmatprep.subr.mxu0 %v1958
        %1983 = vmatpush1.msra.mxu0 %v1955
        %1984 = vmatprep.subr.mxu0 %v1940
        %1985 = vmatpush1.msra.mxu0 %v1916
        %1986 = vmatprep.subr.mxu0 %v1939
        %1987 = vmatpush1.msra.mxu0 %v1915
        %1988 = vmatprep.subr.mxu0 %v1938
        %1989 = vmatpush1.msra.mxu0 %v1914
        %1990 = vmatprep.subr.mxu0 %v1937
        %1991 = vmatpush1.msra.mxu0 %v1913
        %1992 = vmatprep.subr.mxu0 0.0
        %1993 = vmatpush2.msra.mxu0 0.0
        %1994 = vmatprep.subr.mxu0 0.0
        %1995 = vmatpush2.msra.mxu0 0.0
        %1996 = vmatprep.subr.mxu0 0.0
        %1997 = vmatpush2.msra.mxu0 0.0
        %1998 = vmatprep.subr.mxu0 0.0
        %1999 = vmatpush2.msra.mxu0 0.0
        %2000 = vmatprep.subr.mxu0 0.0
        %2001 = vmatpush2.msra.mxu0 0.0
        %2002 = vmatprep.subr.mxu0 0.0
        %2003 = vmatpush2.msra.mxu0 0.0
        %2004 = vmatprep.subr.mxu0 0.0
        %2005 = vmatpush2.msra.mxu0 0.0
        %2006 = vmatprep.subr.mxu0 0.0
        %2007 = vmatpush2.msra.mxu0 0.0
        %2008 = vmatprep.subr.mxu0 0.0
        %2009 = vmatpush2.msra.mxu0 0.0
        %2010 = vmatprep.subr.mxu0 0.0
        %2011 = vmatpush2.msra.mxu0 0.0
        %2012 = vmatprep.subr.mxu0 0.0
        %2013 = vmatpush2.msra.mxu0 0.0
        %2014 = vmatprep.subr.mxu0 0.0
        %2015 = vmatpush2.msra.mxu0 0.0
        %2016 = vmatprep.subr.mxu0 0.0
        %2017 = vmatpush2.msra.mxu0 0.0
        %2018 = vmatprep.subr.mxu0 0.0
        %2019 = vmatpush2.msra.mxu0 0.0
        %2020 = vmatprep.subr.mxu0 0.0
        %2021 = vmatpush2.msra.mxu0 0.0
        %2022 = vmatprep.subr.mxu0 0.0
        %2023 = vmatpush2.msra.mxu0 0.0
        %2024 = vmatprep.mubr.f32.mxu0 0.0
        %2025 = vmatmul.mubr.f32.gmra.mxu0 %v1951
        %v2026 = vpop.f32.mrf.mxu0
        %v2027 = vadd.f32 %v1947, %v2026
        %v2028 = vpop.f32.mrf.mxu0
        %v2029 = vadd.f32 %v1947, %v2028
        %2030 = vdwg.mxu0
        %2032 = vrot.lane.b32.xlu0 %v2027, 114
        %v2033 = vpop.permute.xlu0 %2032
        %2035 = vrot.lane.b32.xlu0 %v2027, 100
        %v2036 = vpop.permute.xlu0 %2035
        %2038 = vrot.lane.b32.xlu0 %v2027, 86
        %v2039 = vpop.permute.xlu0 %2038
        %2041 = vrot.lane.b32.xlu0 %v2027, 72
        %v2042 = vpop.permute.xlu0 %2041
        %2044 = vrot.lane.b32.xlu0 %v2027, 58
        %v2045 = vpop.permute.xlu0 %2044
        %2047 = vrot.lane.b32.xlu0 %v2027, 44
        %v2048 = vpop.permute.xlu0 %2047
        %2050 = vrot.lane.b32.xlu0 %v2027, 30
        %v2051 = vpop.permute.xlu0 %2050
        %2053 = vrot.lane.b32.xlu0 %v2027, 16
        %v2054 = vpop.permute.xlu0 %2053
        %2057 = vrot.lane.b32.xlu0 %v2027, 2
        %v2058 = vpop.permute.xlu0 %2057
        %2059 = vrot.lane.b32.xlu0 %v2029, 2
        %v2060 = vpop.permute.xlu0 %2059
        %vm2061 = vcmask 15360
        %v2062 = vsel %vm2061, %v2058, %v2060
        %2064 = vrot.lane.b32.xlu0 %v2029, 116
        %v2065 = vpop.permute.xlu0 %2064
        %2067 = vrot.lane.b32.xlu0 %v2029, 102
        %v2068 = vpop.permute.xlu0 %2067
        %2070 = vrot.lane.b32.xlu0 %v2029, 88
        %v2071 = vpop.permute.xlu0 %2070
        %2073 = vrot.lane.b32.xlu0 %v2029, 74
        %v2074 = vpop.permute.xlu0 %2073
        %v2076 = vcombine.low %v2027, %v2036
        %v2077 = vcombine.high %v2027, %v2036
        %v2079 = vunpack.c.l.s4 1983009808
        %v2080 = vunpack.c.0.s8 %v2079
        %v2081 = vlaneseq
        %v2082 = vshrl.u32 %v2081, 7
        %v2083 = vsub.s32 %v2080, %v2082
        %v2084 = vrot.slane %v2076, %v2083
        %v2086 = vunpack.c.l.s4 1983009808
        %v2087 = vunpack.c.0.s8 %v2086
        %v2088 = vlaneseq
        %v2089 = vshrl.u32 %v2088, 7
        %v2090 = vsub.s32 %v2087, %v2089
        %v2091 = vrot.slane %v2077, %v2090
        %v2092 = vcombine.low %v2033, %v2039
        %v2093 = vcombine.high %v2033, %v2039
        %v2095 = vunpack.c.l.s4 1983009808
        %v2096 = vunpack.c.0.s8 %v2095
        %v2097 = vlaneseq
        %v2098 = vshrl.u32 %v2097, 7
        %v2099 = vsub.s32 %v2096, %v2098
        %v2100 = vrot.slane %v2092, %v2099
        %v2102 = vunpack.c.l.s4 1983009808
        %v2103 = vunpack.c.0.s8 %v2102
        %v2104 = vlaneseq
        %v2105 = vshrl.u32 %v2104, 7
        %v2106 = vsub.s32 %v2103, %v2105
        %v2107 = vrot.slane %v2093, %v2106
        %v2108 = vcombine.low %v2042, %v2048
        %v2109 = vcombine.high %v2042, %v2048
        %v2111 = vunpack.c.l.s4 1983009808
        %v2112 = vunpack.c.0.s8 %v2111
        %v2113 = vlaneseq
        %v2114 = vshrl.u32 %v2113, 7
        %v2115 = vsub.s32 %v2112, %v2114
        %v2116 = vrot.slane %v2108, %v2115
        %v2118 = vunpack.c.l.s4 1983009808
        %v2119 = vunpack.c.0.s8 %v2118
        %v2120 = vlaneseq
        %v2121 = vshrl.u32 %v2120, 7
        %v2122 = vsub.s32 %v2119, %v2121
        %v2123 = vrot.slane %v2109, %v2122
        %v2124 = vcombine.low %v2045, %v2051
        %v2125 = vcombine.high %v2045, %v2051
        %v2127 = vunpack.c.l.s4 1983009808
        %v2128 = vunpack.c.0.s8 %v2127
        %v2129 = vlaneseq
        %v2130 = vshrl.u32 %v2129, 7
        %v2131 = vsub.s32 %v2128, %v2130
        %v2132 = vrot.slane %v2124, %v2131
        %v2134 = vunpack.c.l.s4 1983009808
        %v2135 = vunpack.c.0.s8 %v2134
        %v2136 = vlaneseq
        %v2137 = vshrl.u32 %v2136, 7
        %v2138 = vsub.s32 %v2135, %v2137
        %v2139 = vrot.slane %v2125, %v2138
        %v2140 = vcombine.low %v2084, %v2100
        %v2141 = vcombine.high %v2084, %v2100
        %v2143 = vunpack.c.l.s4 1934713408
        %v2144 = vunpack.c.0.s8 %v2143
        %v2145 = vlaneseq
        %v2146 = vshrl.u32 %v2145, 7
        %v2147 = vsub.s32 %v2144, %v2146
        %v2148 = vrot.slane %v2140, %v2147
        %v2150 = vunpack.c.l.s4 1934713408
        %v2151 = vunpack.c.0.s8 %v2150
        %v2152 = vlaneseq
        %v2153 = vshrl.u32 %v2152, 7
        %v2154 = vsub.s32 %v2151, %v2153
        %v2155 = vrot.slane %v2141, %v2154
        %v2156 = vcombine.low %v2091, %v2107
        %v2157 = vcombine.high %v2091, %v2107
        %v2159 = vunpack.c.l.s4 1934713408
        %v2160 = vunpack.c.0.s8 %v2159
        %v2161 = vlaneseq
        %v2162 = vshrl.u32 %v2161, 7
        %v2163 = vsub.s32 %v2160, %v2162
        %v2164 = vrot.slane %v2156, %v2163
        %v2166 = vunpack.c.l.s4 1934713408
        %v2167 = vunpack.c.0.s8 %v2166
        %v2168 = vlaneseq
        %v2169 = vshrl.u32 %v2168, 7
        %v2170 = vsub.s32 %v2167, %v2169
        %v2171 = vrot.slane %v2157, %v2170
        %v2172 = vcombine.low %v2116, %v2132
        %v2173 = vcombine.high %v2116, %v2132
        %v2175 = vunpack.c.l.s4 1934713408
        %v2176 = vunpack.c.0.s8 %v2175
        %v2177 = vlaneseq
        %v2178 = vshrl.u32 %v2177, 7
        %v2179 = vsub.s32 %v2176, %v2178
        %v2180 = vrot.slane %v2172, %v2179
        %v2182 = vunpack.c.l.s4 1934713408
        %v2183 = vunpack.c.0.s8 %v2182
        %v2184 = vlaneseq
        %v2185 = vshrl.u32 %v2184, 7
        %v2186 = vsub.s32 %v2183, %v2185
        %v2187 = vrot.slane %v2173, %v2186
        %v2188 = vcombine.low %v2123, %v2139
        %v2189 = vcombine.high %v2123, %v2139
        %v2191 = vunpack.c.l.s4 1934713408
        %v2192 = vunpack.c.0.s8 %v2191
        %v2193 = vlaneseq
        %v2194 = vshrl.u32 %v2193, 7
        %v2195 = vsub.s32 %v2192, %v2194
        %v2196 = vrot.slane %v2188, %v2195
        %v2198 = vunpack.c.l.s4 1934713408
        %v2199 = vunpack.c.0.s8 %v2198
        %v2200 = vlaneseq
        %v2201 = vshrl.u32 %v2200, 7
        %v2202 = vsub.s32 %v2199, %v2201
        %v2203 = vrot.slane %v2189, %v2202
        %v2204 = vcombine.low %v2148, %v2180
        %v2205 = vcombine.high %v2148, %v2180
        %v2206 = vcombine.low %v2155, %v2187
        %v2207 = vcombine.high %v2155, %v2187
        %v2208 = vcombine.low %v2164, %v2196
        %v2209 = vcombine.high %v2164, %v2196
        %v2210 = vcombine.low %v2171, %v2203
        %v2211 = vcombine.high %v2171, %v2203
        %v2212 = vcombine.low %v2054, %v2065
        %v2213 = vcombine.high %v2054, %v2065
        %v2215 = vunpack.c.l.s4 1983009808
        %v2216 = vunpack.c.0.s8 %v2215
        %v2217 = vlaneseq
        %v2218 = vshrl.u32 %v2217, 7
        %v2219 = vsub.s32 %v2216, %v2218
        %v2220 = vrot.slane %v2212, %v2219
        %v2222 = vunpack.c.l.s4 1983009808
        %v2223 = vunpack.c.0.s8 %v2222
        %v2224 = vlaneseq
        %v2225 = vshrl.u32 %v2224, 7
        %v2226 = vsub.s32 %v2223, %v2225
        %v2227 = vrot.slane %v2213, %v2226
        %v2228 = vcombine.low %v2062, %v2068
        %v2229 = vcombine.high %v2062, %v2068
        %v2231 = vunpack.c.l.s4 1983009808
        %v2232 = vunpack.c.0.s8 %v2231
        %v2233 = vlaneseq
        %v2234 = vshrl.u32 %v2233, 7
        %v2235 = vsub.s32 %v2232, %v2234
        %v2236 = vrot.slane %v2228, %v2235
        %v2238 = vunpack.c.l.s4 1983009808
        %v2239 = vunpack.c.0.s8 %v2238
        %v2240 = vlaneseq
        %v2241 = vshrl.u32 %v2240, 7
        %v2242 = vsub.s32 %v2239, %v2241
        %v2243 = vrot.slane %v2229, %v2242
        %v2244 = vcombine.high %v2071, 0.0
        %v2246 = vunpack.c.l.s4 1983009808
        %v2247 = vunpack.c.0.s8 %v2246
        %v2248 = vlaneseq
        %v2249 = vshrl.u32 %v2248, 7
        %v2250 = vsub.s32 %v2247, %v2249
        %v2251 = vrot.slane %v2071, %v2250
        %v2253 = vunpack.c.l.s4 1983009808
        %v2254 = vunpack.c.0.s8 %v2253
        %v2255 = vlaneseq
        %v2256 = vshrl.u32 %v2255, 7
        %v2257 = vsub.s32 %v2254, %v2256
        %v2258 = vrot.slane %v2244, %v2257
        %v2259 = vcombine.high %v2074, 0.0
        %v2261 = vunpack.c.l.s4 1983009808
        %v2262 = vunpack.c.0.s8 %v2261
        %v2263 = vlaneseq
        %v2264 = vshrl.u32 %v2263, 7
        %v2265 = vsub.s32 %v2262, %v2264
        %v2266 = vrot.slane %v2074, %v2265
        %v2268 = vunpack.c.l.s4 1983009808
        %v2269 = vunpack.c.0.s8 %v2268
        %v2270 = vlaneseq
        %v2271 = vshrl.u32 %v2270, 7
        %v2272 = vsub.s32 %v2269, %v2271
        %v2273 = vrot.slane %v2259, %v2272
        %v2274 = vcombine.low %v2220, %v2236
        %v2275 = vcombine.high %v2220, %v2236
        %v2277 = vunpack.c.l.s4 1934713408
        %v2278 = vunpack.c.0.s8 %v2277
        %v2279 = vlaneseq
        %v2280 = vshrl.u32 %v2279, 7
        %v2281 = vsub.s32 %v2278, %v2280
        %v2282 = vrot.slane %v2274, %v2281
        %v2284 = vunpack.c.l.s4 1934713408
        %v2285 = vunpack.c.0.s8 %v2284
        %v2286 = vlaneseq
        %v2287 = vshrl.u32 %v2286, 7
        %v2288 = vsub.s32 %v2285, %v2287
        %v2289 = vrot.slane %v2275, %v2288
        %v2290 = vcombine.low %v2227, %v2243
        %v2291 = vcombine.high %v2227, %v2243
        %v2293 = vunpack.c.l.s4 1934713408
        %v2294 = vunpack.c.0.s8 %v2293
        %v2295 = vlaneseq
        %v2296 = vshrl.u32 %v2295, 7
        %v2297 = vsub.s32 %v2294, %v2296
        %v2298 = vrot.slane %v2290, %v2297
        %v2300 = vunpack.c.l.s4 1934713408
        %v2301 = vunpack.c.0.s8 %v2300
        %v2302 = vlaneseq
        %v2303 = vshrl.u32 %v2302, 7
        %v2304 = vsub.s32 %v2301, %v2303
        %v2305 = vrot.slane %v2291, %v2304
        %v2306 = vcombine.low %v2251, %v2266
        %v2307 = vcombine.high %v2251, %v2266
        %v2309 = vunpack.c.l.s4 1934713408
        %v2310 = vunpack.c.0.s8 %v2309
        %v2311 = vlaneseq
        %v2312 = vshrl.u32 %v2311, 7
        %v2313 = vsub.s32 %v2310, %v2312
        %v2314 = vrot.slane %v2306, %v2313
        %v2316 = vunpack.c.l.s4 1934713408
        %v2317 = vunpack.c.0.s8 %v2316
        %v2318 = vlaneseq
        %v2319 = vshrl.u32 %v2318, 7
        %v2320 = vsub.s32 %v2317, %v2319
        %v2321 = vrot.slane %v2307, %v2320
        %v2322 = vcombine.low %v2258, %v2273
        %v2323 = vcombine.high %v2258, %v2273
        %v2325 = vunpack.c.l.s4 1934713408
        %v2326 = vunpack.c.0.s8 %v2325
        %v2327 = vlaneseq
        %v2328 = vshrl.u32 %v2327, 7
        %v2329 = vsub.s32 %v2326, %v2328
        %v2330 = vrot.slane %v2322, %v2329
        %v2332 = vunpack.c.l.s4 1934713408
        %v2333 = vunpack.c.0.s8 %v2332
        %v2334 = vlaneseq
        %v2335 = vshrl.u32 %v2334, 7
        %v2336 = vsub.s32 %v2333, %v2335
        %v2337 = vrot.slane %v2323, %v2336
        %v2338 = vcombine.low %v2282, %v2314
        %v2339 = vcombine.high %v2282, %v2314
        %v2340 = vcombine.low %v2289, %v2321
        %v2341 = vcombine.high %v2289, %v2321
        %v2342 = vcombine.low %v2298, %v2330
        %v2343 = vcombine.high %v2298, %v2330
        %v2344 = vcombine.low %v2305, %v2337
        %v2345 = vcombine.high %v2305, %v2337
        %s2346 = scalar_lea.vmem %s256, %s257
        %2347 = vst.msk [vmem:[%s2346] sm:$0xff] %vm1864, %v2204
        %vm2348 = vcmask 111616
        %2349 = vst.msk [vmem:[%s2346 + $0x8] sm:$0x3f] %vm2348, %v2338
        %2350 = vst.msk [vmem:[%s2346 + $0x10] sm:$0xff] %vm1864, %v2205
        %2351 = vst.msk [vmem:[%s2346 + $0x18] sm:$0x3f] %vm2348, %v2339
        %2352 = vst.msk [vmem:[%s2346 + $0x20] sm:$0xff] %vm1864, %v2206
        %2353 = vst.msk [vmem:[%s2346 + $0x28] sm:$0x3f] %vm2348, %v2340
        %2354 = vst.msk [vmem:[%s2346 + $0x30] sm:$0xff] %vm1864, %v2207
        %2355 = vst.msk [vmem:[%s2346 + $0x38] sm:$0x3f] %vm2348, %v2341
        %2356 = vst.msk [vmem:[%s2346 + $0x40] sm:$0xff] %vm1864, %v2208
        %2357 = vst.msk [vmem:[%s2346 + $0x48] sm:$0x3f] %vm2348, %v2342
        %2358 = vst.msk [vmem:[%s2346 + $0x50] sm:$0xff] %vm1864, %v2209
        %2359 = vst.msk [vmem:[%s2346 + $0x58] sm:$0x3f] %vm2348, %v2343
        %2360 = vst.msk [vmem:[%s2346 + $0x60] sm:$0xff] %vm1864, %v2210
        %2361 = vst.msk [vmem:[%s2346 + $0x68] sm:$0x3f] %vm2348, %v2344
        %2362 = vst.msk [vmem:[%s2346 + $0x70] sm:$0xff] %vm1864, %v2211
        %2363 = vst.msk [vmem:[%s2346 + $0x78] sm:$0x3f] %vm2348, %v2345
        %p2364 = scmp.eq.s32.totalorder %s24, 0
        // Predicated region
        $region45: #{tpu_custom_call.1} parent=39 // pred_check
          %p2365 = pneg %p2364
        $region46: #{tpu_custom_call.1} parent=39 // pred_check_branch
          %2367 = sbr.rel (%p2365) target = $region48
        $region47: #{tpu_custom_call.1} parent=39 // pred_region
          %v2368 = vld [vmem:[%s256] sm:$0xff]
          %v2369 = vld [vmem:[%s256 + $0x8] sm:$0x3f]
          %v2370 = vld [vmem:[%s256 + $0x10] sm:$0xff]
          %v2371 = vld [vmem:[%s256 + $0x18] sm:$0x3f]
          %v2372 = vld [vmem:[%s256 + $0x20] sm:$0xff]
          %v2373 = vld [vmem:[%s256 + $0x28] sm:$0x3f]
          %v2374 = vld [vmem:[%s256 + $0x30] sm:$0xff]
          %v2375 = vld [vmem:[%s256 + $0x38] sm:$0x3f]
          %v2376 = vld [vmem:[%s256 + $0x40] sm:$0xff]
          %v2377 = vld [vmem:[%s256 + $0x48] sm:$0x3f]
          %v2378 = vld [vmem:[%s256 + $0x50] sm:$0xff]
          %v2379 = vld [vmem:[%s256 + $0x58] sm:$0x3f]
          %v2380 = vld [vmem:[%s256 + $0x60] sm:$0xff]
          %v2381 = vld [vmem:[%s256 + $0x68] sm:$0x3f]
          %v2382 = vld [vmem:[%s256 + $0x70] sm:$0xff]
          %v2383 = vld [vmem:[%s256 + $0x78] sm:$0x3f]
          %v2384 = vsel %vm1864, %v2368, 0.0
          %v2385 = vsel %vm2348, %v2369, 0.0
          %v2386 = vadd.f32 %v2384, %v2385
          %v2387 = vsel %vm1864, %v2370, 0.0
          %v2388 = vadd.f32 %v2386, %v2387
          %v2389 = vsel %vm2348, %v2371, 0.0
          %v2390 = vadd.f32 %v2388, %v2389
          %v2391 = vsel %vm1864, %v2372, 0.0
          %v2392 = vadd.f32 %v2390, %v2391
          %v2393 = vsel %vm2348, %v2373, 0.0
          %v2394 = vadd.f32 %v2392, %v2393
          %v2395 = vsel %vm1864, %v2374, 0.0
          %v2396 = vadd.f32 %v2394, %v2395
          %v2397 = vsel %vm2348, %v2375, 0.0
          %v2398 = vadd.f32 %v2396, %v2397
          %v2399 = vsel %vm1864, %v2376, 0.0
          %v2400 = vadd.f32 %v2398, %v2399
          %v2401 = vsel %vm2348, %v2377, 0.0
          %v2402 = vadd.f32 %v2400, %v2401
          %v2403 = vsel %vm1864, %v2378, 0.0
          %v2404 = vadd.f32 %v2402, %v2403
          %v2405 = vsel %vm2348, %v2379, 0.0
          %v2406 = vadd.f32 %v2404, %v2405
          %v2407 = vsel %vm1864, %v2380, 0.0
          %v2408 = vadd.f32 %v2406, %v2407
          %v2409 = vsel %vm2348, %v2381, 0.0
          %v2410 = vadd.f32 %v2408, %v2409
          %v2411 = vsel %vm1864, %v2382, 0.0
          %v2412 = vadd.f32 %v2410, %v2411
          %v2413 = vsel %vm2348, %v2383, 0.0
          %v2414 = vadd.f32 %v2412, %v2413
          %2415 = vadd.xlane.f32.xlu0 %v2414
          %v2416 = vpop.xlane.xlu0 %2415
          %v2417 = vrot.slane %v2416, 4
          %v2418 = vadd.f32 %v2416, %v2417
          %v2419 = vrot.slane %v2418, 2
          %v2420 = vadd.f32 %v2418, %v2419
          %v2421 = vrot.slane %v2420, 1
          %v2422 = vadd.f32 %v2420, %v2421
          %s2423 = vtos %v2422
          %v2424 = vstv %s2423
          %v2425 = vrcp.pop 1568.0
          %v2426 = vmul.f32 %v2424, %v2425
          %v2427 = vsub.f32 %v2368, %v2426
          %v2428 = vsub.f32 %v2369, %v2426
          %v2429 = vsub.f32 %v2370, %v2426
          %v2430 = vsub.f32 %v2371, %v2426
          %v2431 = vsub.f32 %v2372, %v2426
          %v2432 = vsub.f32 %v2373, %v2426
          %v2433 = vsub.f32 %v2374, %v2426
          %v2434 = vsub.f32 %v2375, %v2426
          %v2435 = vsub.f32 %v2376, %v2426
          %v2436 = vsub.f32 %v2377, %v2426
          %v2437 = vsub.f32 %v2378, %v2426
          %v2438 = vsub.f32 %v2379, %v2426
          %v2439 = vsub.f32 %v2380, %v2426
          %v2440 = vsub.f32 %v2381, %v2426
          %v2441 = vsub.f32 %v2382, %v2426
          %v2442 = vsub.f32 %v2383, %v2426
          %v2443 = vmul.f32 %v2427, %v2427
          %v2444 = vmul.f32 %v2428, %v2428
          %v2445 = vmul.f32 %v2429, %v2429
          %v2446 = vmul.f32 %v2430, %v2430
          %v2447 = vmul.f32 %v2431, %v2431
          %v2448 = vmul.f32 %v2432, %v2432
          %v2449 = vmul.f32 %v2433, %v2433
          %v2450 = vmul.f32 %v2434, %v2434
          %v2451 = vmul.f32 %v2435, %v2435
          %v2452 = vmul.f32 %v2436, %v2436
          %v2453 = vmul.f32 %v2437, %v2437
          %v2454 = vmul.f32 %v2438, %v2438
          %v2455 = vmul.f32 %v2439, %v2439
          %v2456 = vmul.f32 %v2440, %v2440
          %v2457 = vmul.f32 %v2441, %v2441
          %v2458 = vmul.f32 %v2442, %v2442
          %v2459 = vsel %vm1864, %v2443, 0.0
          %v2460 = vsel %vm2348, %v2444, 0.0
          %v2461 = vadd.f32 %v2459, %v2460
          %v2462 = vsel %vm1864, %v2445, 0.0
          %v2463 = vadd.f32 %v2461, %v2462
          %v2464 = vsel %vm2348, %v2446, 0.0
          %v2465 = vadd.f32 %v2463, %v2464
          %v2466 = vsel %vm1864, %v2447, 0.0
          %v2467 = vadd.f32 %v2465, %v2466
          %v2468 = vsel %vm2348, %v2448, 0.0
          %v2469 = vadd.f32 %v2467, %v2468
          %v2470 = vsel %vm1864, %v2449, 0.0
          %v2471 = vadd.f32 %v2469, %v2470
          %v2472 = vsel %vm2348, %v2450, 0.0
          %v2473 = vadd.f32 %v2471, %v2472
          %v2474 = vsel %vm1864, %v2451, 0.0
          %v2475 = vadd.f32 %v2473, %v2474
          %v2476 = vsel %vm2348, %v2452, 0.0
          %v2477 = vadd.f32 %v2475, %v2476
          %v2478 = vsel %vm1864, %v2453, 0.0
          %v2479 = vadd.f32 %v2477, %v2478
          %v2480 = vsel %vm2348, %v2454, 0.0
          %v2481 = vadd.f32 %v2479, %v2480
          %v2482 = vsel %vm1864, %v2455, 0.0
          %v2483 = vadd.f32 %v2481, %v2482
          %v2484 = vsel %vm2348, %v2456, 0.0
          %v2485 = vadd.f32 %v2483, %v2484
          %v2486 = vsel %vm1864, %v2457, 0.0
          %v2487 = vadd.f32 %v2485, %v2486
          %v2488 = vsel %vm2348, %v2458, 0.0
          %v2489 = vadd.f32 %v2487, %v2488
          %2490 = vadd.xlane.f32.xlu0 %v2489
          %v2491 = vpop.xlane.xlu0 %2490
          %v2492 = vrot.slane %v2491, 4
          %v2493 = vadd.f32 %v2491, %v2492
          %v2494 = vrot.slane %v2493, 2
          %v2495 = vadd.f32 %v2493, %v2494
          %v2496 = vrot.slane %v2495, 1
          %v2497 = vadd.f32 %v2495, %v2496
          %s2498 = vtos %v2497
          %v2499 = vstv %s2498
          %v2500 = vmul.f32 %v2499, %v2425
          %v2501 = vadd.f32 %v2500, 1e-05
          %v2502 = vrsqrt.pop %v2501
          %v2503 = vld [vmem:[%s3] sm:$0xff]
          %v2505 = vcombine.high %v2503, %v2503
          %v2507 = vunpack.c.l.s4 1966171168
          %v2508 = vunpack.c.0.s8 %v2507
          %v2509 = vlaneseq
          %v2510 = vshrl.u32 %v2509, 7
          %v2511 = vsub.s32 %v2508, %v2510
          %v2512 = vrot.slane %v2503, %v2511
          %v2514 = vunpack.c.l.s4 1966171168
          %v2515 = vunpack.c.0.s8 %v2514
          %v2516 = vlaneseq
          %v2517 = vshrl.u32 %v2516, 7
          %v2518 = vsub.s32 %v2515, %v2517
          %v2519 = vrot.slane %v2505, %v2518
          %v2520 = vcombine.high %v2512, %v2512
          %v2521 = vcombine.high %v2519, %v2519
          %v2523 = vunpack.c.l.s4 1966171168
          %v2524 = vunpack.c.0.s8 %v2523
          %v2525 = vlaneseq
          %v2526 = vshrl.u32 %v2525, 7
          %v2527 = vsub.s32 %v2524, %v2526
          %v2528 = vrot.slane %v2512, %v2527
          %v2530 = vunpack.c.l.s4 1966171168
          %v2531 = vunpack.c.0.s8 %v2530
          %v2532 = vlaneseq
          %v2533 = vshrl.u32 %v2532, 7
          %v2534 = vsub.s32 %v2531, %v2533
          %v2535 = vrot.slane %v2519, %v2534
          %v2537 = vunpack.c.l.s4 1966171168
          %v2538 = vunpack.c.0.s8 %v2537
          %v2539 = vlaneseq
          %v2540 = vshrl.u32 %v2539, 7
          %v2541 = vsub.s32 %v2538, %v2540
          %v2542 = vrot.slane %v2520, %v2541
          %v2544 = vunpack.c.l.s4 1966171168
          %v2545 = vunpack.c.0.s8 %v2544
          %v2546 = vlaneseq
          %v2547 = vshrl.u32 %v2546, 7
          %v2548 = vsub.s32 %v2545, %v2547
          %v2549 = vrot.slane %v2521, %v2548
          %v2550 = vcombine.high %v2528, %v2528
          %v2551 = vcombine.high %v2535, %v2535
          %v2552 = vcombine.high %v2542, %v2542
          %v2553 = vcombine.high %v2549, %v2549
          %v2562 = vmul.f32 %v2528, %v2502
          %v2563 = vmul.f32 %v2542, %v2502
          %v2564 = vmul.f32 %v2550, %v2502
          %v2565 = vmul.f32 %v2552, %v2502
          %v2566 = vmul.f32 %v2535, %v2502
          %v2567 = vmul.f32 %v2549, %v2502
          %v2568 = vmul.f32 %v2551, %v2502
          %v2569 = vmul.f32 %v2553, %v2502
          %v2570 = vld [vmem:[%s4] sm:$0xff]
          %v2572 = vcombine.high %v2570, %v2570
          %v2574 = vunpack.c.l.s4 1966171168
          %v2575 = vunpack.c.0.s8 %v2574
          %v2576 = vlaneseq
          %v2577 = vshrl.u32 %v2576, 7
          %v2578 = vsub.s32 %v2575, %v2577
          %v2579 = vrot.slane %v2570, %v2578
          %v2581 = vunpack.c.l.s4 1966171168
          %v2582 = vunpack.c.0.s8 %v2581
          %v2583 = vlaneseq
          %v2584 = vshrl.u32 %v2583, 7
          %v2585 = vsub.s32 %v2582, %v2584
          %v2586 = vrot.slane %v2572, %v2585
          %v2587 = vcombine.high %v2579, %v2579
          %v2588 = vcombine.high %v2586, %v2586
          %v2590 = vunpack.c.l.s4 1966171168
          %v2591 = vunpack.c.0.s8 %v2590
          %v2592 = vlaneseq
          %v2593 = vshrl.u32 %v2592, 7
          %v2594 = vsub.s32 %v2591, %v2593
          %v2595 = vrot.slane %v2579, %v2594
          %v2597 = vunpack.c.l.s4 1966171168
          %v2598 = vunpack.c.0.s8 %v2597
          %v2599 = vlaneseq
          %v2600 = vshrl.u32 %v2599, 7
          %v2601 = vsub.s32 %v2598, %v2600
          %v2602 = vrot.slane %v2586, %v2601
          %v2604 = vunpack.c.l.s4 1966171168
          %v2605 = vunpack.c.0.s8 %v2604
          %v2606 = vlaneseq
          %v2607 = vshrl.u32 %v2606, 7
          %v2608 = vsub.s32 %v2605, %v2607
          %v2609 = vrot.slane %v2587, %v2608
          %v2611 = vunpack.c.l.s4 1966171168
          %v2612 = vunpack.c.0.s8 %v2611
          %v2613 = vlaneseq
          %v2614 = vshrl.u32 %v2613, 7
          %v2615 = vsub.s32 %v2612, %v2614
          %v2616 = vrot.slane %v2588, %v2615
          %v2617 = vcombine.high %v2595, %v2595
          %v2618 = vcombine.high %v2602, %v2602
          %v2619 = vcombine.high %v2609, %v2609
          %v2620 = vcombine.high %v2616, %v2616
          %v2629 = vlaneseq
          %v2630 = vshrl.u32 %v2629, 7
          %v2631 = vsub.s32 0, %v2630
          %v2632 = vrot.slane %v2562, %v2631
          %v2633 = vlaneseq
          %v2634 = vshrl.u32 %v2633, 7
          %v2635 = vsub.s32 0, %v2634
          %v2636 = vrot.slane %v2563, %v2635
          %v2637 = vlaneseq
          %v2638 = vshrl.u32 %v2637, 7
          %v2639 = vsub.s32 0, %v2638
          %v2640 = vrot.slane %v2564, %v2639
          %v2641 = vlaneseq
          %v2642 = vshrl.u32 %v2641, 7
          %v2643 = vsub.s32 0, %v2642
          %v2644 = vrot.slane %v2565, %v2643
          %v2645 = vlaneseq
          %v2646 = vshrl.u32 %v2645, 7
          %v2647 = vsub.s32 0, %v2646
          %v2648 = vrot.slane %v2566, %v2647
          %v2649 = vlaneseq
          %v2650 = vshrl.u32 %v2649, 7
          %v2651 = vsub.s32 0, %v2650
          %v2652 = vrot.slane %v2567, %v2651
          %v2653 = vlaneseq
          %v2654 = vshrl.u32 %v2653, 7
          %v2655 = vsub.s32 0, %v2654
          %v2656 = vrot.slane %v2568, %v2655
          %v2657 = vlaneseq
          %v2658 = vshrl.u32 %v2657, 7
          %v2659 = vsub.s32 0, %v2658
          %v2660 = vrot.slane %v2569, %v2659
          %2661 = vset.pattern.permute.xlu0 0
          %2662 = vperm.xlu0 %2661, %v2632
          %v2663 = vpop.permute.xlu0 %2662
          %2665 = vset.pattern.permute.xlu0 0
          %2666 = vperm.xlu0 %2665, %v2636
          %v2667 = vpop.permute.xlu0 %2666
          %2669 = vset.pattern.permute.xlu0 0
          %2670 = vperm.xlu0 %2669, %v2640
          %v2671 = vpop.permute.xlu0 %2670
          %2673 = vset.pattern.permute.xlu0 0
          %2674 = vperm.xlu0 %2673, %v2644
          %v2675 = vpop.permute.xlu0 %2674
          %2677 = vset.pattern.permute.xlu0 0
          %2678 = vperm.xlu0 %2677, %v2648
          %v2679 = vpop.permute.xlu0 %2678
          %2681 = vset.pattern.permute.xlu0 0
          %2682 = vperm.xlu0 %2681, %v2652
          %v2683 = vpop.permute.xlu0 %2682
          %2685 = vset.pattern.permute.xlu0 0
          %2686 = vperm.xlu0 %2685, %v2656
          %v2687 = vpop.permute.xlu0 %2686
          %2689 = vset.pattern.permute.xlu0 0
          %2690 = vperm.xlu0 %2689, %v2660
          %v2691 = vpop.permute.xlu0 %2690
          %v2693 = vmul.f32 %v2427, %v2663
          %v2694 = vmul.f32 %v2428, %v2663
          %v2695 = vmul.f32 %v2429, %v2667
          %v2696 = vmul.f32 %v2430, %v2667
          %v2697 = vmul.f32 %v2431, %v2671
          %v2698 = vmul.f32 %v2432, %v2671
          %v2699 = vmul.f32 %v2433, %v2675
          %v2700 = vmul.f32 %v2434, %v2675
          %v2701 = vmul.f32 %v2435, %v2679
          %v2702 = vmul.f32 %v2436, %v2679
          %v2703 = vmul.f32 %v2437, %v2683
          %v2704 = vmul.f32 %v2438, %v2683
          %v2705 = vmul.f32 %v2439, %v2687
          %v2706 = vmul.f32 %v2440, %v2687
          %v2707 = vmul.f32 %v2441, %v2691
          %v2708 = vmul.f32 %v2442, %v2691
          %v2709 = vlaneseq
          %v2710 = vshrl.u32 %v2709, 7
          %v2711 = vsub.s32 0, %v2710
          %v2712 = vrot.slane %v2595, %v2711
          %v2713 = vlaneseq
          %v2714 = vshrl.u32 %v2713, 7
          %v2715 = vsub.s32 0, %v2714
          %v2716 = vrot.slane %v2609, %v2715
          %v2717 = vlaneseq
          %v2718 = vshrl.u32 %v2717, 7
          %v2719 = vsub.s32 0, %v2718
          %v2720 = vrot.slane %v2617, %v2719
          %v2721 = vlaneseq
          %v2722 = vshrl.u32 %v2721, 7
          %v2723 = vsub.s32 0, %v2722
          %v2724 = vrot.slane %v2619, %v2723
          %v2725 = vlaneseq
          %v2726 = vshrl.u32 %v2725, 7
          %v2727 = vsub.s32 0, %v2726
          %v2728 = vrot.slane %v2602, %v2727
          %v2729 = vlaneseq
          %v2730 = vshrl.u32 %v2729, 7
          %v2731 = vsub.s32 0, %v2730
          %v2732 = vrot.slane %v2616, %v2731
          %v2733 = vlaneseq
          %v2734 = vshrl.u32 %v2733, 7
          %v2735 = vsub.s32 0, %v2734
          %v2736 = vrot.slane %v2618, %v2735
          %v2737 = vlaneseq
          %v2738 = vshrl.u32 %v2737, 7
          %v2739 = vsub.s32 0, %v2738
          %v2740 = vrot.slane %v2620, %v2739
          %2741 = vset.pattern.permute.xlu0 0
          %2742 = vperm.xlu0 %2741, %v2712
          %v2743 = vpop.permute.xlu0 %2742
          %2745 = vset.pattern.permute.xlu0 0
          %2746 = vperm.xlu0 %2745, %v2716
          %v2747 = vpop.permute.xlu0 %2746
          %2749 = vset.pattern.permute.xlu0 0
          %2750 = vperm.xlu0 %2749, %v2720
          %v2751 = vpop.permute.xlu0 %2750
          %2753 = vset.pattern.permute.xlu0 0
          %2754 = vperm.xlu0 %2753, %v2724
          %v2755 = vpop.permute.xlu0 %2754
          %2757 = vset.pattern.permute.xlu0 0
          %2758 = vperm.xlu0 %2757, %v2728
          %v2759 = vpop.permute.xlu0 %2758
          %2761 = vset.pattern.permute.xlu0 0
          %2762 = vperm.xlu0 %2761, %v2732
          %v2763 = vpop.permute.xlu0 %2762
          %2765 = vset.pattern.permute.xlu0 0
          %2766 = vperm.xlu0 %2765, %v2736
          %v2767 = vpop.permute.xlu0 %2766
          %2769 = vset.pattern.permute.xlu0 0
          %2770 = vperm.xlu0 %2769, %v2740
          %v2771 = vpop.permute.xlu0 %2770
          %v2773 = vadd.f32 %v2693, %v2743
          %v2774 = vadd.f32 %v2694, %v2743
          %v2775 = vadd.f32 %v2695, %v2747
          %v2776 = vadd.f32 %v2696, %v2747
          %v2777 = vadd.f32 %v2697, %v2751
          %v2778 = vadd.f32 %v2698, %v2751
          %v2779 = vadd.f32 %v2699, %v2755
          %v2780 = vadd.f32 %v2700, %v2755
          %v2781 = vadd.f32 %v2701, %v2759
          %v2782 = vadd.f32 %v2702, %v2759
          %v2783 = vadd.f32 %v2703, %v2763
          %v2784 = vadd.f32 %v2704, %v2763
          %v2785 = vadd.f32 %v2705, %v2767
          %v2786 = vadd.f32 %v2706, %v2767
          %v2787 = vadd.f32 %v2707, %v2771
          %v2788 = vadd.f32 %v2708, %v2771
          %2789 = vst.msk [vmem:[%s256] sm:$0xff] %vm1864, %v2773
          %2790 = vst.msk [vmem:[%s256 + $0x8] sm:$0x3f] %vm2348, %v2774
          %2791 = vst.msk [vmem:[%s256 + $0x10] sm:$0xff] %vm1864, %v2775
          %2792 = vst.msk [vmem:[%s256 + $0x18] sm:$0x3f] %vm2348, %v2776
          %2793 = vst.msk [vmem:[%s256 + $0x20] sm:$0xff] %vm1864, %v2777
          %2794 = vst.msk [vmem:[%s256 + $0x28] sm:$0x3f] %vm2348, %v2778
          %2795 = vst.msk [vmem:[%s256 + $0x30] sm:$0xff] %vm1864, %v2779
          %2796 = vst.msk [vmem:[%s256 + $0x38] sm:$0x3f] %vm2348, %v2780
          %2797 = vst.msk [vmem:[%s256 + $0x40] sm:$0xff] %vm1864, %v2781
          %2798 = vst.msk [vmem:[%s256 + $0x48] sm:$0x3f] %vm2348, %v2782
          %2799 = vst.msk [vmem:[%s256 + $0x50] sm:$0xff] %vm1864, %v2783
          %2800 = vst.msk [vmem:[%s256 + $0x58] sm:$0x3f] %vm2348, %v2784
          %2801 = vst.msk [vmem:[%s256 + $0x60] sm:$0xff] %vm1864, %v2785
          %2802 = vst.msk [vmem:[%s256 + $0x68] sm:$0x3f] %vm2348, %v2786
          %2803 = vst.msk [vmem:[%s256 + $0x70] sm:$0xff] %vm1864, %v2787
          %2804 = vst.msk [vmem:[%s256 + $0x78] sm:$0x3f] %vm2348, %v2788
        $region48: #{tpu_custom_call.1} parent=39 // pred_fallthru
          _
        %p2805 = scmp.lt.s32.totalorder %s23, 1
        %s2806 = scalar_select %p2805, %s23, 1
        %s2807 = smul.addr %s2806, 16
        %s2808 = smul.addr %s2807, 8
        %s2809 = scalar_lea.vmem %s5, %s2808
        // Predicated region
        $region49: #{tpu_custom_call.1} parent=39 // pred_check
          %p2810 = pneg %p159
        $region50: #{tpu_custom_call.1} parent=39 // pred_check_branch
          %2812 = sbr.rel (%p2810) target = $region52
        $region51: #{tpu_custom_call.1} parent=39 // pred_region
          _
        $region52: #{tpu_custom_call.1} parent=39 // pred_fallthru
          _
      $region40: #{tpu_custom_call.1} parent=5 // pred_fallthru
        _
      %p2813 = scmp.le.s32.totalorder 2, %s14
      // Predicated region
      $region53: #{tpu_custom_call.1} parent=5 // pred_check
        %p2814 = pneg %p2813
      $region54: #{tpu_custom_call.1} parent=5 // pred_check_branch
        %2816 = sbr.rel (%p2814) target = $region56
      $region55: #{tpu_custom_call.1} parent=5 // pred_region
        %s2817 = ssub.s32 %s14, 2
        // Predicated region
        $region57: #{tpu_custom_call.1} parent=55 // pred_check
          %p2818 = pneg %p165
        $region58: #{tpu_custom_call.1} parent=55 // pred_check_branch
          %2820 = sbr.rel (%p2818) target = $region60
        $region59: #{tpu_custom_call.1} parent=55 // pred_region
          %p2821 = scmp.lt.s32.totalorder %s25, 1
          %s2822 = scalar_select %p2821, %s25, 1
          %s2823 = smul.addr %s2822, 16
          %s2824 = smul.addr %s2823, 8
          %s2825 = scalar_lea.vmem %s5, %s2824
        $region60: #{tpu_custom_call.1} parent=55 // pred_fallthru
          _
      $region56: #{tpu_custom_call.1} parent=5 // pred_fallthru
        _
    $region6: #{tpu_custom_call.1} parent=1 // loop_footer
      %s18 = sadd.s32 1, %s14
    $region7: #{tpu_custom_call.1} parent=1 // loop_footer_branch
      %13 = sbr.rel target = $region3
    $region8: #{tpu_custom_call.1} parent=1 // loop_exit
      _
    %2826 = vsyncpa [#allocation3], 1
    %s2827 = scalar_lea.sflag [#allocation3], 1
    %2828 = vsyncpa %s2827, 1

</llo_original>
